<compile_context>
chip_gen: v7x
topology: tpu7x:2x2x1
jax: 0.10.0
libtpu: 0.0.40
codegen_flags: <defaults>
</compile_context>

<pallas_src>
import functools
import math

import jax
import jax.numpy as jnp
from jax.experimental import pallas as pl
from jax.experimental.pallas import tpu as pltpu


def _pick_query_tile(S):
    # largest modest tile that evenly divides S (keeps the (H, tq, S) score tile bounded)
    for cand in (128, 64, 32, 16, 8):
        if S % cand == 0:
            return cand
    return S  # odd sequence length: single full-sequence tile


def _vmem_limit_bytes():
    # ~3/4 of physical VMEM: 48 MiB on v7x (64 MiB/TC), 96 MiB on v5e/v6e (128 MiB).
    try:
        cap = int(pltpu.get_tpu_info().vmem_capacity_bytes)
        return min((cap * 3) // 4, 100 * 1024 * 1024)
    except Exception:
        return 64 * 1024 * 1024


def _vd_attention_kernel(n_head, d_head, tq, eps, exp_bf16, approx_recip, qkv_chunk,
                         h_full_ref, h_res_ref, mask_ref,
                         wqkv_ref, bqkv_ref, wo_ref, bo_ref, gamma_ref, beta_ref,
                         out_ref,
                         q_scr, kvT_scr):
    t = pl.program_id(1)
    S = h_full_ref.shape[1]
    D = n_head * d_head

    # ---- once per batch element: fused QKV projection over the full sequence ----
    @pl.when(t == 0)
    def _():
        # chunk S to bound the (ch, 3D) f32 transient on small-VMEM parts (v7x)
        ch = qkv_chunk if (S > qkv_chunk and S % qkv_chunk == 0) else S
        for c0 in range(0, S, ch):
            x16 = h_full_ref[0, c0:c0 + ch, :].astype(jnp.bfloat16)              # (ch, D)
            qkv = jnp.dot(x16, wqkv_ref[...],
                          preferred_element_type=jnp.float32) + bqkv_ref[...]    # (ch, 3D) f32
            # Q (1/sqrt(dh) already folded into Wq/bq): one flat lane-dense store.
            q_scr[c0:c0 + ch, :] = qkv[:, :D].astype(jnp.bfloat16)
            # K, V stored transposed/head-major: one 2-D transpose + leading-dim split;
            # keeps S in the lane dim of the scratch (no per-head partial stores).
            kvT = qkv[:, D:].T.astype(jnp.bfloat16)                              # (2D, ch)
            kvT_scr[:, :, :, c0:c0 + ch] = kvT.reshape(2, n_head, d_head, ch)

    # ---- per query tile: attention batched over heads ----
    start = pl.multiple_of(t * tq, tq)
    q_flat = q_scr[pl.ds(start, tq), :]                                          # (tq, D) bf16
    # (tq, D) -> (H, tq, dh) using only a 2-D transpose, a leading-dim split and a
    # batched minor-dim transpose (all cheap/supported relayouts).
    q_h = (q_flat.astype(jnp.float32).T
           .reshape(n_head, d_head, tq)
           .transpose(0, 2, 1)
           .astype(jnp.bfloat16))                                                # (H, tq, dh)
    kT = kvT_scr[0]                                                              # (H, dh, S) bf16
    vT = kvT_scr[1]                                                              # (H, dh, S) bf16

    # scores: canonical batched matmul (lhs contracts last dim, rhs contracts first non-batch dim)
    s = jnp.einsum('hqd,hds->hqs', q_h, kT,
                   preferred_element_type=jnp.float32)                           # (H, tq, S)
    s = s + mask_ref[...] * (-1e30)                                              # (1,1,S) broadcast
    s = s - jnp.max(s, axis=-1, keepdims=True)                                   # stable softmax

    if exp_bf16:                      # v6e/v7x only: EUP supports packed bf16 (keep False on v5e)
        p = jnp.exp(s.astype(jnp.bfloat16))
        l = jnp.sum(p.astype(jnp.float32), axis=-1)                              # (H, tq) f32
        p16 = p
    else:
        p = jnp.exp(s)                                                           # f32 EUP
        l = jnp.sum(p, axis=-1)                                                  # (H, tq) f32
        p16 = p.astype(jnp.bfloat16)

    # AV with un-normalized probabilities, producing ctx already head-transposed (H, dh, tq);
    # batched trans_b matmul (both operands contract their last dim).
    ctxT = jnp.einsum('hds,hqs->hdq', vT, p16,
                      preferred_element_type=jnp.float32)                        # (H, dh, tq)

    # post-AV softmax normalization: H*tq*dh multiplies instead of H*tq*S.
    if approx_recip:
        inv_l = pl.reciprocal(l, approx=True)   # ~1e-3-level rel. error on attention rows
    else:
        inv_l = 1.0 / l
    ctxT = ctxT * inv_l[:, None, :]

    # merge heads for free ((H, dh) -> D on the sublane axis) and fuse into the output
    # projection as a single full-K trans_a matmul: o = ctx^T @ Wo  (no concatenate).
    ctx2d = ctxT.reshape(D, tq).astype(jnp.bfloat16)                             # (D, tq)
    o = jax.lax.dot_general(ctx2d, wo_ref[...],
                            dimension_numbers=(((0,), (0,)), ((), ())),
                            preferred_element_type=jnp.float32) + bo_ref[...]    # (tq, D) f32

    # residual + LayerNorm in f32 (dropout is identity in eval mode)
    x = o + h_res_ref[0]
    mean = jnp.mean(x, axis=-1, keepdims=True)
    xc = x - mean
    var = jnp.mean(xc * xc, axis=-1, keepdims=True)
    y = xc * jax.lax.rsqrt(var + eps)
    out_ref[0] = (y * gamma_ref[...] + beta_ref[...]).astype(out_ref.dtype)


def vd_attention(h, padding_mask, params, *, n_head, eps=1e-12, q_tile=None,
                 exp_in_bf16=False, approx_softmax_recip=True, qkv_chunk=512):
    B, S, D = h.shape
    assert D % n_head == 0
    d_head = D // n_head
    wq, bq, wk, bk, wv, bv, wo, bo, gamma, beta = params

    # Fold 1/sqrt(d_head) into Wq AND bq (q = h@Wq + bq is scaled as a whole).
    scale = 1.0 / math.sqrt(d_head)
    wqkv = jnp.concatenate([wq * scale, wk, wv], axis=1).astype(jnp.bfloat16)   # (D, 3D)
    bqkv = jnp.concatenate([bq * scale, bk, bv], axis=1).astype(jnp.float32)    # (1, 3D)
    wo16 = wo.astype(jnp.bfloat16)
    bo32 = bo.astype(jnp.float32)
    gamma32 = gamma.astype(jnp.float32)
    beta32 = beta.astype(jnp.float32)
    mask3 = padding_mask.astype(jnp.float32).reshape(B, 1, S)                   # (B, 1, S)

    tq = q_tile if q_tile is not None else _pick_query_tile(S)
    assert S % tq == 0
    n_qt = S // tq

    kernel = functools.partial(_vd_attention_kernel, n_head, d_head, tq, eps,
                               exp_in_bf16, approx_softmax_recip, qkv_chunk)

    def const_spec(shape):
        # Constant-index blocks (weights / biases / LN params): fetched once by the pipeline.
        return pl.BlockSpec(shape, lambda b, t: (0,) * len(shape))

    fn = pl.pallas_call(
        kernel,
        out_shape=jax.ShapeDtypeStruct((B, S, D), h.dtype),
        grid=(B, n_qt),
        in_specs=[
            pl.BlockSpec((1, S, D), lambda b, t: (b, 0, 0)),    # h full sequence (t==0 QKV only)
            pl.BlockSpec((1, tq, D), lambda b, t: (b, t, 0)),   # h query tile (residual add)
            pl.BlockSpec((1, 1, S), lambda b, t: (b, 0, 0)),    # padding mask row
            const_spec((D, 3 * D)),                             # Wqkv (bf16, scale folded into Wq)
            const_spec((1, 3 * D)),                             # bqkv (f32)
            const_spec((D, D)),                                 # Wo (bf16)
            const_spec((1, D)),                                 # bo
            const_spec((1, D)),                                 # LN gamma
            const_spec((1, D)),                                 # LN beta
        ],
        out_specs=pl.BlockSpec((1, tq, D), lambda b, t: (b, t, 0)),
        scratch_shapes=[
            pltpu.VMEM((S, D), jnp.bfloat16),                    # Q, flat (lane-dense)
            pltpu.VMEM((2, n_head, d_head, S), jnp.bfloat16),    # K^T / V^T head-major (S in lanes)
        ],
        compiler_params=pltpu.CompilerParams(
            dimension_semantics=("parallel", "arbitrary"),
            vmem_limit_bytes=_vmem_limit_bytes()),
    )
    return fn(h, h, mask3, wqkv, bqkv, wo16, bo32, gamma32, beta32)


def vd_attention_ref(h, padding_mask, params, *, n_head, eps=1e-12):
    """Pure-JAX f32 reference reproducing the PyTorch module semantics."""
    wq, bq, wk, bk, wv, bv, wo, bo, gamma, beta = params
    B, S, D = h.shape
    d_head = D // n_head
    q = h @ wq + bq
    k = h @ wk + bk
    v = h @ wv + bv
    split = lambda x: x.reshape(B, S, n_head, d_head).transpose(0, 2, 1, 3)
    ql, kl, vl = split(q), split(k), split(v)
    s = jnp.einsum('bhqd,bhkd->bhqk', ql, kl) / math.sqrt(d_head)
    s = s - 1e30 * padding_mask[:, None, None, :]
    p = jax.nn.softmax(s, axis=-1)
    ctx = jnp.einsum('bhqk,bhkd->bhqd', p, vl).transpose(0, 2, 1, 3).reshape(B, S, D)
    x = ctx @ wo + bo + h
    mean = x.mean(-1, keepdims=True)
    var = ((x - mean) ** 2).mean(-1, keepdims=True)
    return (x - mean) / jnp.sqrt(var + eps) * gamma + beta


if __name__ == "__main__":
    B, D, n_head = 2, 32, 4
    f32 = jnp.float32
    key = jax.random.PRNGKey(0)
    keys = jax.random.split(key, 12)

    wq = 0.02 * jax.random.normal(keys[0], (D, D), f32)
    bq = 0.01 * jax.random.normal(keys[1], (1, D), f32)
    wk = 0.02 * jax.random.normal(keys[2], (D, D), f32)
    bk = 0.01 * jax.random.normal(keys[3], (1, D), f32)
    wv = 0.02 * jax.random.normal(keys[4], (D, D), f32)
    bv = 0.01 * jax.random.normal(keys[5], (1, D), f32)
    wo = 0.02 * jax.random.normal(keys[6], (D, D), f32)
    bo = 0.01 * jax.random.normal(keys[7], (1, D), f32)
    gamma = jnp.ones((1, D), f32)
    beta = jnp.zeros((1, D), f32)
    params = (wq, bq, wk, bk, wv, bv, wo, bo, gamma, beta)

    # MXU operands are bf16 inside the kernel (softmax / LayerNorm stay f32),
    # so compare against the f32 reference with a bf16-appropriate tolerance.
    tol = dict(atol=1e-2, rtol=1e-2)

    # case 1: S=8 (single query tile); batch 1 has its last 3 key positions padded
    S = 8
    h = jax.random.normal(keys[8], (B, S, D), f32)
    lengths = jnp.array([8, 5], dtype=jnp.int32)
    mask = (jnp.arange(S)[None, :] >= lengths[:, None]).astype(f32)   # (B, S), 1.0 = padded
    out = jax.block_until_ready(vd_attention(h, mask, params, n_head=n_head))
    ref = vd_attention_ref(h, mask, params, n_head=n_head)
    assert out.shape == (B, S, D)
    assert jnp.allclose(out, ref, **tol), "case 1: mismatch vs pure-JAX reference"

    # case 2: S=16 with q_tile=8 -> exercises multiple query tiles reusing the Q/K/V scratch
    S = 16
    h2 = jax.random.normal(keys[9], (B, S, D), f32)
    lengths2 = jnp.array([16, 11], dtype=jnp.int32)
    mask2 = (jnp.arange(S)[None, :] >= lengths2[:, None]).astype(f32)
    out2 = jax.block_until_ready(vd_attention(h2, mask2, params, n_head=n_head, q_tile=8))
    ref2 = vd_attention_ref(h2, mask2, params, n_head=n_head)
    assert jnp.allclose(out2, ref2, **tol), "case 2: mismatch vs pure-JAX reference"

    print("KERNEL_OK")
</pallas_src>

<mosaic_0001>
module attributes {stable_mosaic.version = 11 : i64} {
  func.func @_vd_attention_kernel(%arg0: i32, %arg1: i32, %arg2: memref<1x8x32xf32, #tpu.memory_space<vmem>>, %arg3: memref<1x8x32xf32, #tpu.memory_space<vmem>>, %arg4: memref<1x1x8xf32, #tpu.memory_space<vmem>>, %arg5: memref<32x96xbf16, #tpu.memory_space<vmem>>, %arg6: memref<1x96xf32, #tpu.memory_space<vmem>>, %arg7: memref<32x32xbf16, #tpu.memory_space<vmem>>, %arg8: memref<1x32xf32, #tpu.memory_space<vmem>>, %arg9: memref<1x32xf32, #tpu.memory_space<vmem>>, %arg10: memref<1x32xf32, #tpu.memory_space<vmem>>, %arg11: memref<1x8x32xf32, #tpu.memory_space<vmem>>, %arg12: memref<8x32xbf16, #tpu.memory_space<vmem>>, %arg13: memref<2x4x8x8xbf16, #tpu.memory_space<vmem>>) attributes {dimension_semantics = [#tpu.dimension_semantics<parallel>, #tpu.dimension_semantics<arbitrary>], iteration_bounds = array<i64: 2, 1>, scalar_prefetch = 0 : i64, scratch_operands = 2 : i64, tpu.core_type = #tpu.core_type<tc>, window_params = [{transform_indices = @transform_0, window_bounds = array<i64: 1, 8, 32>}, {transform_indices = @transform_1, window_bounds = array<i64: 1, 8, 32>}, {transform_indices = @transform_2, window_bounds = array<i64: 1, 1, 8>}, {pipeline_mode = #tpu.pipeline_mode<synchronous>, transform_indices = @transform_3, window_bounds = array<i64: 32, 96>}, {pipeline_mode = #tpu.pipeline_mode<synchronous>, transform_indices = @transform_4, window_bounds = array<i64: 1, 96>}, {pipeline_mode = #tpu.pipeline_mode<synchronous>, transform_indices = @transform_5, window_bounds = array<i64: 32, 32>}, {pipeline_mode = #tpu.pipeline_mode<synchronous>, transform_indices = @transform_6, window_bounds = array<i64: 1, 32>}, {pipeline_mode = #tpu.pipeline_mode<synchronous>, transform_indices = @transform_7, window_bounds = array<i64: 1, 32>}, {pipeline_mode = #tpu.pipeline_mode<synchronous>, transform_indices = @transform_8, window_bounds = array<i64: 1, 32>}, {transform_indices = @transform_9, window_bounds = array<i64: 1, 8, 32>}]} {
    %c0_i32 = arith.constant 0 : i32
    %0 = arith.cmpi eq, %arg1, %c0_i32 : i32
    %1 = arith.extui %0 : i1 to i32
    %c0_i32_0 = arith.constant 0 : i32
    %2 = arith.cmpi ne, %1, %c0_i32_0 : i32
    scf.if %2 {
      %c0_35 = arith.constant 0 : index
      %c0_36 = arith.constant 0 : index
      %c0_37 = arith.constant 0 : index
      %69 = vector.load %arg2[%c0_35, %c0_36, %c0_37] : memref<1x8x32xf32, #tpu.memory_space<vmem>>, vector<1x8x32xf32>
      %70 = vector.shape_cast %69 : vector<1x8x32xf32> to vector<8x32xf32>
      %71 = arith.truncf %70 : vector<8x32xf32> to vector<8x32xbf16>
      %c0_38 = arith.constant 0 : index
      %c0_39 = arith.constant 0 : index
      %72 = vector.load %arg5[%c0_38, %c0_39] : memref<32x96xbf16, #tpu.memory_space<vmem>>, vector<32x96xbf16>
      %cst_40 = arith.constant dense<0.000000e+00> : vector<8x96xf32>
      %73 = tpu.matmul %71, %72, %cst_40 {dimension_numbers = #tpu.dot_dimension_numbers<[1], [0], [0], [1], [0, 0, 1, 1], [], []>} : vector<8x32xbf16>, vector<32x96xbf16>, vector<8x96xf32> -> vector<8x96xf32>
      %c0_41 = arith.constant 0 : index
      %c0_42 = arith.constant 0 : index
      %74 = vector.load %arg6[%c0_41, %c0_42] : memref<1x96xf32, #tpu.memory_space<vmem>>, vector<1x96xf32>
      %75 = vector.broadcast %74 : vector<1x96xf32> to vector<8x96xf32>
      %76 = arith.addf %73, %75 : vector<8x96xf32>
      %77 = vector.extract_strided_slice %76 {offsets = [0, 0], sizes = [8, 32], strides = [1, 1]} : vector<8x96xf32> to vector<8x32xf32>
      %78 = arith.truncf %77 : vector<8x32xf32> to vector<8x32xbf16>
      %c0_43 = arith.constant 0 : index
      %c0_44 = arith.constant 0 : index
      %79 = vector.load %arg12[%c0_43, %c0_44] : memref<8x32xbf16, #tpu.memory_space<vmem>>, vector<8x32xbf16>
      tpu.vector_store %arg12[%c0_43, %c0_44], %78 {strides = array<i32>} : memref<8x32xbf16, #tpu.memory_space<vmem>>, vector<8x32xbf16>,
      %80 = vector.extract_strided_slice %76 {offsets = [0, 32], sizes = [8, 64], strides = [1, 1]} : vector<8x96xf32> to vector<8x64xf32>
      %81 = tpu.transpose %80, [1, 0] : vector<8x64xf32> -> vector<64x8xf32>
      %82 = arith.truncf %81 : vector<64x8xf32> to vector<64x8xbf16>
      %83 = vector.shape_cast %82 : vector<64x8xbf16> to vector<2x4x8x8xbf16>
      %c0_45 = arith.constant 0 : index
      %c0_46 = arith.constant 0 : index
      %c0_47 = arith.constant 0 : index
      %c0_48 = arith.constant 0 : index
      %84 = vector.load %arg13[%c0_45, %c0_46, %c0_47, %c0_48] : memref<2x4x8x8xbf16, #tpu.memory_space<vmem>>, vector<2x4x8x8xbf16>
      tpu.vector_store %arg13[%c0_45, %c0_46, %c0_47, %c0_48], %83 {strides = array<i32>} : memref<2x4x8x8xbf16, #tpu.memory_space<vmem>>, vector<2x4x8x8xbf16>,
    } else {
    }
    %c8_i32 = arith.constant 8 : i32
    %3 = arith.muli %arg1, %c8_i32 : i32
    %4 = tpu.assume_multiple %3, 8 : i32
    %5 = arith.index_cast %4 : i32 to index
    %c0 = arith.constant 0 : index
    %6 = vector.load %arg12[%5, %c0] : memref<8x32xbf16, #tpu.memory_space<vmem>>, vector<8x32xbf16>
    %7 = arith.extf %6 : vector<8x32xbf16> to vector<8x32xf32>
    %8 = tpu.transpose %7, [1, 0] : vector<8x32xf32> -> vector<32x8xf32>
    %9 = vector.shape_cast %8 : vector<32x8xf32> to vector<4x8x8xf32>
    %10 = tpu.transpose %9, [0, 2, 1] : vector<4x8x8xf32> -> vector<4x8x8xf32>
    %11 = arith.truncf %10 : vector<4x8x8xf32> to vector<4x8x8xbf16>
    %c0_1 = arith.constant 0 : index
    %c0_2 = arith.constant 0 : index
    %c0_3 = arith.constant 0 : index
    %c0_4 = arith.constant 0 : index
    %12 = vector.load %arg13[%c0_1, %c0_2, %c0_3, %c0_4] : memref<2x4x8x8xbf16, #tpu.memory_space<vmem>>, vector<1x4x8x8xbf16>
    %13 = vector.shape_cast %12 : vector<1x4x8x8xbf16> to vector<4x8x8xbf16>
    %c1 = arith.constant 1 : index
    %c0_5 = arith.constant 0 : index
    %c0_6 = arith.constant 0 : index
    %c0_7 = arith.constant 0 : index
    %14 = vector.load %arg13[%c1, %c0_5, %c0_6, %c0_7] : memref<2x4x8x8xbf16, #tpu.memory_space<vmem>>, vector<1x4x8x8xbf16>
    %15 = vector.shape_cast %14 : vector<1x4x8x8xbf16> to vector<4x8x8xbf16>
    "tpu.trace_start"() <{level = 10 : i32, message = "hqd,hds->hqs"}> : () -> ()
    %cst = arith.constant dense<0.000000e+00> : vector<4x8x8xf32>
    %16 = tpu.matmul %11, %13, %cst {dimension_numbers = #tpu.dot_dimension_numbers<[2], [1], [1], [2], [0, 0, 0, 1, 1, 2], [0], [0]>} : vector<4x8x8xbf16>, vector<4x8x8xbf16>, vector<4x8x8xf32> -> vector<4x8x8xf32>
    "tpu.trace_stop"() : () -> ()
    %c0_8 = arith.constant 0 : index
    %c0_9 = arith.constant 0 : index
    %c0_10 = arith.constant 0 : index
    %17 = vector.load %arg4[%c0_8, %c0_9, %c0_10] : memref<1x1x8xf32, #tpu.memory_space<vmem>>, vector<1x1x8xf32>
    %cst_11 = arith.constant -1.000000e+30 : f32
    %18 = vector.broadcast %cst_11 : f32 to vector<1x1x8xf32>
    %19 = arith.mulf %17, %18 : vector<1x1x8xf32>
    %20 = vector.broadcast %19 : vector<1x1x8xf32> to vector<4x8x8xf32>
    %21 = arith.addf %16, %20 : vector<4x8x8xf32>
    %cst_12 = arith.constant dense<0xFF800000> : vector<4x8xf32>
    %22 = vector.multi_reduction <maximumf>, %21, %cst_12 [2] : vector<4x8x8xf32> to vector<4x8xf32>
    %23 = vector.shape_cast %22 : vector<4x8xf32> to vector<4x8x1xf32>
    %24 = vector.broadcast %23 : vector<4x8x1xf32> to vector<4x8x8xf32>
    %25 = arith.subf %21, %24 : vector<4x8x8xf32>
    %26 = math.exp %25 : vector<4x8x8xf32>
    %cst_13 = arith.constant dense<0.000000e+00> : vector<4x8xf32>
    %27 = vector.multi_reduction <add>, %26, %cst_13 [2] : vector<4x8x8xf32> to vector<4x8xf32>
    %28 = arith.truncf %26 : vector<4x8x8xf32> to vector<4x8x8xbf16>
    "tpu.trace_start"() <{level = 10 : i32, message = "hds,hqs->hdq"}> : () -> ()
    %cst_14 = arith.constant dense<0.000000e+00> : vector<4x8x8xf32>
    %29 = tpu.matmul %15, %28, %cst_14 {dimension_numbers = #tpu.dot_dimension_numbers<[2], [2], [1], [1], [0, 0, 0, 1, 1, 1], [0], [0]>} : vector<4x8x8xbf16>, vector<4x8x8xbf16>, vector<4x8x8xf32> -> vector<4x8x8xf32>
    "tpu.trace_stop"() : () -> ()
    %30 = tpu.reciprocal %27 {approx = true} : vector<4x8xf32> -> vector<4x8xf32>
    %31 = vector.shape_cast %30 : vector<4x8xf32> to vector<4x1x8xf32>
    %32 = vector.broadcast %31 : vector<4x1x8xf32> to vector<4x8x8xf32>
    %33 = arith.mulf %29, %32 : vector<4x8x8xf32>
    %34 = vector.shape_cast %33 : vector<4x8x8xf32> to vector<32x8xf32>
    %35 = arith.truncf %34 : vector<32x8xf32> to vector<32x8xbf16>
    %c0_15 = arith.constant 0 : index
    %c0_16 = arith.constant 0 : index
    %36 = vector.load %arg7[%c0_15, %c0_16] : memref<32x32xbf16, #tpu.memory_space<vmem>>, vector<32x32xbf16>
    %cst_17 = arith.constant dense<0.000000e+00> : vector<8x32xf32>
    %37 = tpu.matmul %35, %36, %cst_17 {dimension_numbers = #tpu.dot_dimension_numbers<[0], [0], [1], [1], [0, 1, 1, 1], [], []>} : vector<32x8xbf16>, vector<32x32xbf16>, vector<8x32xf32> -> vector<8x32xf32>
    %c0_18 = arith.constant 0 : index
    %c0_19 = arith.constant 0 : index
    %38 = vector.load %arg8[%c0_18, %c0_19] : memref<1x32xf32, #tpu.memory_space<vmem>>, vector<1x32xf32>
    %39 = vector.broadcast %38 : vector<1x32xf32> to vector<8x32xf32>
    %40 = arith.addf %37, %39 : vector<8x32xf32>
    %c0_20 = arith.constant 0 : index
    %c0_21 = arith.constant 0 : index
    %c0_22 = arith.constant 0 : index
    %41 = vector.load %arg3[%c0_20, %c0_21, %c0_22] : memref<1x8x32xf32, #tpu.memory_space<vmem>>, vector<1x8x32xf32>
    %42 = vector.shape_cast %41 : vector<1x8x32xf32> to vector<8x32xf32>
    %43 = arith.addf %40, %42 : vector<8x32xf32>
    %cst_23 = arith.constant dense<0.000000e+00> : vector<8xf32>
    %44 = vector.multi_reduction <add>, %43, %cst_23 [1] : vector<8x32xf32> to vector<8xf32>
    %45 = vector.shape_cast %44 : vector<8xf32> to vector<8x1xf32>
    %cst_24 = arith.constant 3.200000e+01 : f32
    %46 = vector.broadcast %cst_24 : f32 to vector<8x1xf32>
    %47 = arith.divf %45, %46 : vector<8x1xf32>
    %48 = vector.broadcast %47 : vector<8x1xf32> to vector<8x32xf32>
    %49 = arith.subf %43, %48 : vector<8x32xf32>
    %50 = arith.mulf %49, %49 : vector<8x32xf32>
    %cst_25 = arith.constant dense<0.000000e+00> : vector<8xf32>
    %51 = vector.multi_reduction <add>, %50, %cst_25 [1] : vector<8x32xf32> to vector<8xf32>
    %52 = vector.shape_cast %51 : vector<8xf32> to vector<8x1xf32>
    %cst_26 = arith.constant 3.200000e+01 : f32
    %53 = vector.broadcast %cst_26 : f32 to vector<8x1xf32>
    %54 = arith.divf %52, %53 : vector<8x1xf32>
    %cst_27 = arith.constant 9.99999996E-13 : f32
    %55 = vector.broadcast %cst_27 : f32 to vector<8x1xf32>
    %56 = arith.addf %54, %55 : vector<8x1xf32>
    %57 = math.rsqrt %56 : vector<8x1xf32>
    %58 = vector.broadcast %57 : vector<8x1xf32> to vector<8x32xf32>
    %59 = arith.mulf %49, %58 : vector<8x32xf32>
    %c0_28 = arith.constant 0 : index
    %c0_29 = arith.constant 0 : index
    %60 = vector.load %arg9[%c0_28, %c0_29] : memref<1x32xf32, #tpu.memory_space<vmem>>, vector<1x32xf32>
    %61 = vector.broadcast %60 : vector<1x32xf32> to vector<8x32xf32>
    %62 = arith.mulf %59, %61 : vector<8x32xf32>
    %c0_30 = arith.constant 0 : index
    %c0_31 = arith.constant 0 : index
    %63 = vector.load %arg10[%c0_30, %c0_31] : memref<1x32xf32, #tpu.memory_space<vmem>>, vector<1x32xf32>
    %64 = vector.broadcast %63 : vector<1x32xf32> to vector<8x32xf32>
    %65 = arith.addf %62, %64 : vector<8x32xf32>
    %c0_32 = arith.constant 0 : index
    %c0_33 = arith.constant 0 : index
    %c0_34 = arith.constant 0 : index
    %66 = vector.load %arg11[%c0_32, %c0_33, %c0_34] : memref<1x8x32xf32, #tpu.memory_space<vmem>>, vector<1x8x32xf32>
    %67 = vector.shape_cast %66 : vector<1x8x32xf32> to vector<8x32xf32>
    %68 = vector.shape_cast %65 : vector<8x32xf32> to vector<1x8x32xf32>
    tpu.vector_store %arg11[%c0_32, %c0_33, %c0_34], %68 {strides = array<i32>} : memref<1x8x32xf32, #tpu.memory_space<vmem>>, vector<1x8x32xf32>,
    return
  }
  func.func @transform_0(%arg0: i32, %arg1: i32) -> (i32, i32, i32) {
    %c0_i32 = arith.constant 0 : i32
    %c0_i32_0 = arith.constant 0 : i32
    %c0_i32_1 = arith.constant 0 : i32
    return %arg0, %c0_i32, %c0_i32_0 : i32, i32, i32
  }
  func.func @transform_1(%arg0: i32, %arg1: i32) -> (i32, i32, i32) {
    %c0_i32 = arith.constant 0 : i32
    %c0_i32_0 = arith.constant 0 : i32
    return %arg0, %arg1, %c0_i32 : i32, i32, i32
  }
  func.func @transform_2(%arg0: i32, %arg1: i32) -> (i32, i32, i32) {
    %c0_i32 = arith.constant 0 : i32
    %c0_i32_0 = arith.constant 0 : i32
    %c0_i32_1 = arith.constant 0 : i32
    return %arg0, %c0_i32, %c0_i32_0 : i32, i32, i32
  }
  func.func @transform_3(%arg0: i32, %arg1: i32) -> (i32, i32) {
    %c0_i32 = arith.constant 0 : i32
    %c0_i32_0 = arith.constant 0 : i32
    %c0_i32_1 = arith.constant 0 : i32
    return %c0_i32, %c0_i32_0 : i32, i32
  }
  func.func @transform_4(%arg0: i32, %arg1: i32) -> (i32, i32) {
    %c0_i32 = arith.constant 0 : i32
    %c0_i32_0 = arith.constant 0 : i32
    %c0_i32_1 = arith.constant 0 : i32
    return %c0_i32, %c0_i32_0 : i32, i32
  }
  func.func @transform_5(%arg0: i32, %arg1: i32) -> (i32, i32) {
    %c0_i32 = arith.constant 0 : i32
    %c0_i32_0 = arith.constant 0 : i32
    %c0_i32_1 = arith.constant 0 : i32
    return %c0_i32, %c0_i32_0 : i32, i32
  }
  func.func @transform_6(%arg0: i32, %arg1: i32) -> (i32, i32) {
    %c0_i32 = arith.constant 0 : i32
    %c0_i32_0 = arith.constant 0 : i32
    %c0_i32_1 = arith.constant 0 : i32
    return %c0_i32, %c0_i32_0 : i32, i32
  }
  func.func @transform_7(%arg0: i32, %arg1: i32) -> (i32, i32) {
    %c0_i32 = arith.constant 0 : i32
    %c0_i32_0 = arith.constant 0 : i32
    %c0_i32_1 = arith.constant 0 : i32
    return %c0_i32, %c0_i32_0 : i32, i32
  }
  func.func @transform_8(%arg0: i32, %arg1: i32) -> (i32, i32) {
    %c0_i32 = arith.constant 0 : i32
    %c0_i32_0 = arith.constant 0 : i32
    %c0_i32_1 = arith.constant 0 : i32
    return %c0_i32, %c0_i32_0 : i32, i32
  }
  func.func @transform_9(%arg0: i32, %arg1: i32) -> (i32, i32, i32) {
    %c0_i32 = arith.constant 0 : i32
    %c0_i32_0 = arith.constant 0 : i32
    return %arg0, %arg1, %c0_i32 : i32, i32, i32
  }
}

</mosaic_0001>

<llo_original>
// kernel: tpu_custom_call.1
$region0: #{tpu_custom_call.1}
  #allocation0 [shape = 'u32[]', space=smem, size = 0x4, offset = 0x4, fixed_abs, tag = 'smem constant byte address 0x4 - core index']
  #allocation1 [shape = 'u32[144,128]{1,0:T(1,128)}', space=vmem, size = 0x12000, scoped, tag = 'internal scratch']
  #allocation2 [shape = 'bf16[8,32]{1,0:T(8,128)(2,1)}', space=vmem, size = 0x800, scoped, tag = 'scratch operand']
  #allocation3 [shape = 'bf16[2,4,8,8]{3,2,1,0:T(8,128)(2,1)}', space=vmem, size = 0x4000, scoped, tag = 'scratch operand']
  %s0 = inlined_call_operand.hbm [shape: f32[2,8,32], index: 0, kind: input, shape index: {}]
  %s1 = inlined_call_operand.hbm [shape: f32[2,8,32], index: 1, kind: input, shape index: {}]
  %s2 = inlined_call_operand.hbm [shape: f32[2,1,8], index: 2, kind: input, shape index: {}]
  %s3 = inlined_call_operand.hbm [shape: bf16[32,96], index: 3, kind: input, shape index: {}]
  %s4 = inlined_call_operand.hbm [shape: f32[1,96], index: 4, kind: input, shape index: {}]
  %s5 = inlined_call_operand.hbm [shape: bf16[32,32], index: 5, kind: input, shape index: {}]
  %s6 = inlined_call_operand.hbm [shape: f32[1,32], index: 6, kind: input, shape index: {}]
  %s7 = inlined_call_operand.hbm [shape: f32[1,32], index: 7, kind: input, shape index: {}]
  %s8 = inlined_call_operand.hbm [shape: f32[1,32], index: 8, kind: input, shape index: {}]
  %s9 = inlined_call_operand.hbm [shape: f32[2,8,32], index: 9, kind: output, shape index: {}]
  %s10 = sld [smem:[#allocation0]]
  $region109: #{tpu_custom_call.1} parent=0
    _
  %s12 = ssub.s32 1, %s10
  %s13 = scalar_select 0, %s12, %s10
  $region1: #{tpu_custom_call.1} parent=0
    #allocation4 [shape = 'u8[8192]{0}', space=vmem, size = 0x2000, scoped, tag = 'input window, operand 0']
    #allocation5 [shape = 's32[2]{0}', space=sflag, size = 0x8, scoped, tag = 'scoped memory for tpu_custom_call.1']
    #allocation6 [shape = 's32[2]{0}', space=sflag, size = 0x8, scoped, tag = 'scoped memory for tpu_custom_call.1']
    #allocation7 [shape = 'u8[8192]{0}', space=vmem, size = 0x2000, scoped, tag = 'input window, operand 1']
    #allocation8 [shape = 's32[2]{0}', space=sflag, size = 0x8, scoped, tag = 'scoped memory for tpu_custom_call.1']
    #allocation9 [shape = 'u8[1024]{0}', space=vmem, size = 0x400, scoped, tag = 'input window, operand 2']
    #allocation10 [shape = 'u8[8192]{0}', space=vmem, size = 0x2000, scoped, tag = 'input window, operand 3, single buffered']
    #allocation11 [shape = 's32[1]{0}', space=sflag, size = 0x4, scoped, tag = 'scoped memory for tpu_custom_call.1']
    #allocation12 [shape = 'u8[512]{0}', space=vmem, size = 0x400, scoped, tag = 'input window, operand 4, single buffered']
    #allocation13 [shape = 'u8[8192]{0}', space=vmem, size = 0x2000, scoped, tag = 'input window, operand 5, single buffered']
    #allocation14 [shape = 's32[1]{0}', space=sflag, size = 0x4, scoped, tag = 'scoped memory for tpu_custom_call.1']
    #allocation15 [shape = 'u8[512]{0}', space=vmem, size = 0x400, scoped, tag = 'input window, operand 6, single buffered']
    #allocation16 [shape = 'u8[512]{0}', space=vmem, size = 0x400, scoped, tag = 'input window, operand 7, single buffered']
    #allocation17 [shape = 's32[1]{0}', space=sflag, size = 0x4, scoped, tag = 'scoped memory for tpu_custom_call.1']
    #allocation18 [shape = 'u8[512]{0}', space=vmem, size = 0x400, scoped, tag = 'input window, operand 8, single buffered']
    #allocation19 [shape = 'u8[8192]{0}', space=vmem, size = 0x2000, scoped, tag = 'output window, operand 0']
    %14 = vsyncpa [#allocation5], 0
    %s15 = scalar_lea.sflag [#allocation5], 1
    %16 = vsyncpa %s15, 0
    %17 = vsyncpa [#allocation8], 0
    %s18 = scalar_lea.sflag [#allocation8], 1
    %19 = vsyncpa %s18, 0
    %20 = vsyncpa [#allocation11], 0
    %21 = vsyncpa [#allocation14], 0
    %22 = vsyncpa [#allocation17], 0
    %23 = vsyncpa [#allocation6], 0
    %s24 = scalar_lea.sflag [#allocation6], 1
    %25 = vsyncpa %s24, 0
    loop: start=0, step=1, limit=4
    $region2: #{tpu_custom_call.1} parent=1 // loop_pre_header
      _
    $region3: #{tpu_custom_call.1} parent=1 // loop_header
      %s27 = sphi 0, %s31
      %p28 = scmp.ge.s32.totalorder %s27, 4
      %s34 = sphi 0, %s46
      %s35 = sphi 0, %s42
      %s36 = sphi 0, %s34
      %s37 = sphi 0, %s35
      %s38 = sphi 0, %s36
      %s39 = sphi 0, %s37
      %s49 = sphi 0, %s51
      %s52 = sphi 0, %s49
      %s53 = sphi 0, %s52
      %s69 = sphi 0, %s53
      %s77 = sphi 0, %s79
      %s80 = sphi 0, %s77
      %s81 = sphi 0, %s80
      %s97 = sphi 0, %s81
      %s103 = sphi 0, %s105
      %s106 = sphi 0, %s103
      %s107 = sphi 0, %s106
      %s123 = sphi 0, %s107
      %s127 = sphi 0, %s127
      %s129 = sphi 0, %s127
      %s130 = sphi 0, %s129
      %s144 = sphi 0, %s130
      %s148 = sphi 0, %s148
      %s150 = sphi 0, %s148
      %s151 = sphi 0, %s150
      %s165 = sphi 0, %s151
      %s169 = sphi 0, %s169
      %s171 = sphi 0, %s169
      %s172 = sphi 0, %s171
      %s186 = sphi 0, %s172
      %s190 = sphi 0, %s190
      %s192 = sphi 0, %s190
      %s193 = sphi 0, %s192
      %s207 = sphi 0, %s193
      %s211 = sphi 0, %s211
      %s213 = sphi 0, %s211
      %s214 = sphi 0, %s213
      %s228 = sphi 0, %s214
      %s232 = sphi 0, %s232
      %s234 = sphi 0, %s232
      %s235 = sphi 0, %s234
      %s249 = sphi 0, %s235
      %s257 = sphi 0, %s259
      %s260 = sphi 0, %s257
      %s261 = sphi 0, %s260
      %s277 = sphi 0, %s261
    $region4: #{tpu_custom_call.1} parent=1 // loop_header_branch
      %30 = sbr.rel (%p28) target = $region8
    $region5: #{tpu_custom_call.1} parent=1 // loop_body
      %s32 = ssub.s32 %s27, 1
      %s33 = ssub.s32 %s27, 2
      %s40 = sadd.s32 1, %s35
      %p41 = scmp.ge.s32.totalorder %s40, 1
      %s42 = scalar_select %p41, 0, %s40
      %s43 = sadd.s32 1, %s34
      %s44 = scalar_select %p41, %s43, %s34
      %p45 = scmp.ge.s32.totalorder %s44, 2
      %s46 = scalar_select %p45, 0, %s44
      %s47 = ssub.s32 %s34, %s46
      %p48 = scmp.eq.s32.totalorder %s47, 0
      %s50 = sadd.s32 %s49, 1
      %s51 = scalar_select %p48, %s49, %s50
      %p54 = pneg %p48
      %p55 = scmp.eq.s32.totalorder %s27, 1
      %p56 = por %p54, %p55
      %p57 = scmp.ne.s32.totalorder %s49, %s52
      %p58 = scmp.eq.s32.totalorder %s27, 0
      %p59 = por %p57, %p58
      %p60 = scmp.ne.s32.totalorder %s49, %s52
      %p61 = scmp.eq.s32.totalorder %s32, 1
      %p62 = por %p60, %p61
      %p63 = scmp.ne.s32.totalorder %s52, %s53
      %p64 = scmp.eq.s32.totalorder %s32, 0
      %p65 = por %p63, %p64
      %p66 = scmp.ne.s32.totalorder %s52, %s53
      %p67 = scmp.eq.s32.totalorder %s33, 1
      %p68 = por %p66, %p67
      %p70 = scmp.ne.s32.totalorder %s53, %s69
      %p71 = scmp.eq.s32.totalorder %s33, 0
      %p72 = por %p70, %p71
      %s73 = ssub.s32 %s34, %s46
      %s74 = ssub.s32 %s35, %s42
      %s75 = sor.u32 %s73, %s74
      %p76 = scmp.eq.s32.totalorder %s75, 0
      %s78 = sadd.s32 %s77, 1
      %s79 = scalar_select %p76, %s77, %s78
      %p82 = pneg %p76
      %p83 = scmp.eq.s32.totalorder %s27, 1
      %p84 = por %p82, %p83
      %p85 = scmp.ne.s32.totalorder %s77, %s80
      %p86 = scmp.eq.s32.totalorder %s27, 0
      %p87 = por %p85, %p86
      %p88 = scmp.ne.s32.totalorder %s77, %s80
      %p89 = scmp.eq.s32.totalorder %s32, 1
      %p90 = por %p88, %p89
      %p91 = scmp.ne.s32.totalorder %s80, %s81
      %p92 = scmp.eq.s32.totalorder %s32, 0
      %p93 = por %p91, %p92
      %p94 = scmp.ne.s32.totalorder %s80, %s81
      %p95 = scmp.eq.s32.totalorder %s33, 1
      %p96 = por %p94, %p95
      %p98 = scmp.ne.s32.totalorder %s81, %s97
      %p99 = scmp.eq.s32.totalorder %s33, 0
      %p100 = por %p98, %p99
      %s101 = ssub.s32 %s34, %s46
      %p102 = scmp.eq.s32.totalorder %s101, 0
      %s104 = sadd.s32 %s103, 1
      %s105 = scalar_select %p102, %s103, %s104
      %p108 = pneg %p102
      %p109 = scmp.eq.s32.totalorder %s27, 1
      %p110 = por %p108, %p109
      %p111 = scmp.ne.s32.totalorder %s103, %s106
      %p112 = scmp.eq.s32.totalorder %s27, 0
      %p113 = por %p111, %p112
      %p114 = scmp.ne.s32.totalorder %s103, %s106
      %p115 = scmp.eq.s32.totalorder %s32, 1
      %p116 = por %p114, %p115
      %p117 = scmp.ne.s32.totalorder %s106, %s107
      %p118 = scmp.eq.s32.totalorder %s32, 0
      %p119 = por %p117, %p118
      %p120 = scmp.ne.s32.totalorder %s106, %s107
      %p121 = scmp.eq.s32.totalorder %s33, 1
      %p122 = por %p120, %p121
      %p124 = scmp.ne.s32.totalorder %s107, %s123
      %p125 = scmp.eq.s32.totalorder %s33, 0
      %p126 = por %p124, %p125
      %s128 = sadd.s32 %s127, 1
      %p131 = scmp.eq.s32.totalorder %s27, 1
      %p132 = scmp.ne.s32.totalorder %s127, %s129
      %p133 = scmp.eq.s32.totalorder %s27, 0
      %p134 = por %p132, %p133
      %p135 = scmp.ne.s32.totalorder %s127, %s129
      %p136 = scmp.eq.s32.totalorder %s32, 1
      %p137 = por %p135, %p136
      %p138 = scmp.ne.s32.totalorder %s129, %s130
      %p139 = scmp.eq.s32.totalorder %s32, 0
      %p140 = por %p138, %p139
      %p141 = scmp.ne.s32.totalorder %s129, %s130
      %p142 = scmp.eq.s32.totalorder %s33, 1
      %p143 = por %p141, %p142
      %p145 = scmp.ne.s32.totalorder %s130, %s144
      %p146 = scmp.eq.s32.totalorder %s33, 0
      %p147 = por %p145, %p146
      %s149 = sadd.s32 %s148, 1
      %p152 = scmp.eq.s32.totalorder %s27, 1
      %p153 = scmp.ne.s32.totalorder %s148, %s150
      %p154 = scmp.eq.s32.totalorder %s27, 0
      %p155 = por %p153, %p154
      %p156 = scmp.ne.s32.totalorder %s148, %s150
      %p157 = scmp.eq.s32.totalorder %s32, 1
      %p158 = por %p156, %p157
      %p159 = scmp.ne.s32.totalorder %s150, %s151
      %p160 = scmp.eq.s32.totalorder %s32, 0
      %p161 = por %p159, %p160
      %p162 = scmp.ne.s32.totalorder %s150, %s151
      %p163 = scmp.eq.s32.totalorder %s33, 1
      %p164 = por %p162, %p163
      %p166 = scmp.ne.s32.totalorder %s151, %s165
      %p167 = scmp.eq.s32.totalorder %s33, 0
      %p168 = por %p166, %p167
      %s170 = sadd.s32 %s169, 1
      %p173 = scmp.eq.s32.totalorder %s27, 1
      %p174 = scmp.ne.s32.totalorder %s169, %s171
      %p175 = scmp.eq.s32.totalorder %s27, 0
      %p176 = por %p174, %p175
      %p177 = scmp.ne.s32.totalorder %s169, %s171
      %p178 = scmp.eq.s32.totalorder %s32, 1
      %p179 = por %p177, %p178
      %p180 = scmp.ne.s32.totalorder %s171, %s172
      %p181 = scmp.eq.s32.totalorder %s32, 0
      %p182 = por %p180, %p181
      %p183 = scmp.ne.s32.totalorder %s171, %s172
      %p184 = scmp.eq.s32.totalorder %s33, 1
      %p185 = por %p183, %p184
      %p187 = scmp.ne.s32.totalorder %s172, %s186
      %p188 = scmp.eq.s32.totalorder %s33, 0
      %p189 = por %p187, %p188
      %s191 = sadd.s32 %s190, 1
      %p194 = scmp.eq.s32.totalorder %s27, 1
      %p195 = scmp.ne.s32.totalorder %s190, %s192
      %p196 = scmp.eq.s32.totalorder %s27, 0
      %p197 = por %p195, %p196
      %p198 = scmp.ne.s32.totalorder %s190, %s192
      %p199 = scmp.eq.s32.totalorder %s32, 1
      %p200 = por %p198, %p199
      %p201 = scmp.ne.s32.totalorder %s192, %s193
      %p202 = scmp.eq.s32.totalorder %s32, 0
      %p203 = por %p201, %p202
      %p204 = scmp.ne.s32.totalorder %s192, %s193
      %p205 = scmp.eq.s32.totalorder %s33, 1
      %p206 = por %p204, %p205
      %p208 = scmp.ne.s32.totalorder %s193, %s207
      %p209 = scmp.eq.s32.totalorder %s33, 0
      %p210 = por %p208, %p209
      %s212 = sadd.s32 %s211, 1
      %p215 = scmp.eq.s32.totalorder %s27, 1
      %p216 = scmp.ne.s32.totalorder %s211, %s213
      %p217 = scmp.eq.s32.totalorder %s27, 0
      %p218 = por %p216, %p217
      %p219 = scmp.ne.s32.totalorder %s211, %s213
      %p220 = scmp.eq.s32.totalorder %s32, 1
      %p221 = por %p219, %p220
      %p222 = scmp.ne.s32.totalorder %s213, %s214
      %p223 = scmp.eq.s32.totalorder %s32, 0
      %p224 = por %p222, %p223
      %p225 = scmp.ne.s32.totalorder %s213, %s214
      %p226 = scmp.eq.s32.totalorder %s33, 1
      %p227 = por %p225, %p226
      %p229 = scmp.ne.s32.totalorder %s214, %s228
      %p230 = scmp.eq.s32.totalorder %s33, 0
      %p231 = por %p229, %p230
      %s233 = sadd.s32 %s232, 1
      %p236 = scmp.eq.s32.totalorder %s27, 1
      %p237 = scmp.ne.s32.totalorder %s232, %s234
      %p238 = scmp.eq.s32.totalorder %s27, 0
      %p239 = por %p237, %p238
      %p240 = scmp.ne.s32.totalorder %s232, %s234
      %p241 = scmp.eq.s32.totalorder %s32, 1
      %p242 = por %p240, %p241
      %p243 = scmp.ne.s32.totalorder %s234, %s235
      %p244 = scmp.eq.s32.totalorder %s32, 0
      %p245 = por %p243, %p244
      %p246 = scmp.ne.s32.totalorder %s234, %s235
      %p247 = scmp.eq.s32.totalorder %s33, 1
      %p248 = por %p246, %p247
      %p250 = scmp.ne.s32.totalorder %s235, %s249
      %p251 = scmp.eq.s32.totalorder %s33, 0
      %p252 = por %p250, %p251
      %s253 = ssub.s32 %s34, %s46
      %s254 = ssub.s32 %s35, %s42
      %s255 = sor.u32 %s253, %s254
      %p256 = scmp.eq.s32.totalorder %s255, 0
      %s258 = sadd.s32 %s257, 1
      %s259 = scalar_select %p256, %s257, %s258
      %p262 = pneg %p256
      %p263 = scmp.eq.s32.totalorder %s27, 1
      %p264 = por %p262, %p263
      %p265 = scmp.ne.s32.totalorder %s257, %s260
      %p266 = scmp.eq.s32.totalorder %s27, 0
      %p267 = por %p265, %p266
      %p268 = scmp.ne.s32.totalorder %s257, %s260
      %p269 = scmp.eq.s32.totalorder %s32, 1
      %p270 = por %p268, %p269
      %p271 = scmp.ne.s32.totalorder %s260, %s261
      %p272 = scmp.eq.s32.totalorder %s32, 0
      %p273 = por %p271, %p272
      %p274 = scmp.ne.s32.totalorder %s260, %s261
      %p275 = scmp.eq.s32.totalorder %s33, 1
      %p276 = por %p274, %p275
      %p278 = scmp.ne.s32.totalorder %s261, %s277
      %p279 = scmp.eq.s32.totalorder %s33, 0
      %p280 = por %p278, %p279
      %p281 = scmp.le.s32.totalorder 1, %s27
      %p282 = scmp.lt.s32.totalorder %s27, 3
      %p283 = pnand %p281, %p282
      %p284 = pneg %p283
      // Predicated region
      $region9: #{tpu_custom_call.1} parent=5 // pred_check
        _
      $region10: #{tpu_custom_call.1} parent=5 // pred_check_branch
        %286 = sbr.rel (%p283) target = $region12
      $region11: #{tpu_custom_call.1} parent=5 // pred_region
        %s287 = ssub.s32 %s27, 1
        // Predicated region
        $region13: #{tpu_custom_call.1} parent=11 // pred_check
          %p288 = pneg %p140
        $region14: #{tpu_custom_call.1} parent=11 // pred_check_branch
          %290 = sbr.rel (%p288) target = $region16
        $region15: #{tpu_custom_call.1} parent=11 // pred_region
          %s292 = ssub.s32 256, 256
          %293 = vsyncadd [#allocation11], %s292
          %s294 = sshll.u32 [#allocation10], 4
          %s295 = int_to_ptr.vmem [resolvable:$true] %s294
          %300 = dma.hbm_to_vmem [thread:$0]  %s3, 256, %s295, [#allocation11], 64, 64, 4
        $region16: #{tpu_custom_call.1} parent=11 // pred_fallthru
          _
        // Predicated region
        $region17: #{tpu_custom_call.1} parent=11 // pred_check
          %p301 = pneg %p161
        $region18: #{tpu_custom_call.1} parent=11 // pred_check_branch
          %303 = sbr.rel (%p301) target = $region20
        $region19: #{tpu_custom_call.1} parent=11 // pred_region
          %s305 = ssub.s32 16, 16
          %306 = vsyncadd [#allocation11], %s305
          %s308 = sshll.u32 [#allocation12], 4
          %s309 = int_to_ptr.vmem [resolvable:$true] %s308
          %311 = dma.hbm_to_vmem [thread:$0]  %s4, 16, %s309, [#allocation11]
        $region20: #{tpu_custom_call.1} parent=11 // pred_fallthru
          _
        // Predicated region
        $region21: #{tpu_custom_call.1} parent=11 // pred_check
          %p312 = pneg %p182
        $region22: #{tpu_custom_call.1} parent=11 // pred_check_branch
          %314 = sbr.rel (%p312) target = $region24
        $region23: #{tpu_custom_call.1} parent=11 // pred_region
          %s316 = ssub.s32 256, 256
          %317 = vsyncadd [#allocation14], %s316
          %s318 = sshll.u32 [#allocation13], 4
          %s319 = int_to_ptr.vmem [resolvable:$true] %s318
          %324 = dma.hbm_to_vmem [thread:$0]  %s5, 256, %s319, [#allocation14], 64, 64, 4
        $region24: #{tpu_custom_call.1} parent=11 // pred_fallthru
          _
        // Predicated region
        $region25: #{tpu_custom_call.1} parent=11 // pred_check
          %p325 = pneg %p203
        $region26: #{tpu_custom_call.1} parent=11 // pred_check_branch
          %327 = sbr.rel (%p325) target = $region28
        $region27: #{tpu_custom_call.1} parent=11 // pred_region
          %s329 = ssub.s32 16, 16
          %330 = vsyncadd [#allocation14], %s329
          %s332 = sshll.u32 [#allocation15], 4
          %s333 = int_to_ptr.vmem [resolvable:$true] %s332
          %335 = dma.hbm_to_vmem [thread:$0]  %s6, 16, %s333, [#allocation14]
        $region28: #{tpu_custom_call.1} parent=11 // pred_fallthru
          _
        // Predicated region
        $region29: #{tpu_custom_call.1} parent=11 // pred_check
          %p336 = pneg %p224
        $region30: #{tpu_custom_call.1} parent=11 // pred_check_branch
          %338 = sbr.rel (%p336) target = $region32
        $region31: #{tpu_custom_call.1} parent=11 // pred_region
          %s340 = ssub.s32 16, 16
          %341 = vsyncadd [#allocation17], %s340
          %s343 = sshll.u32 [#allocation16], 4
          %s344 = int_to_ptr.vmem [resolvable:$true] %s343
          %346 = dma.hbm_to_vmem [thread:$0]  %s7, 16, %s344, [#allocation17]
        $region32: #{tpu_custom_call.1} parent=11 // pred_fallthru
          _
        // Predicated region
        $region33: #{tpu_custom_call.1} parent=11 // pred_check
          %p347 = pneg %p245
        $region34: #{tpu_custom_call.1} parent=11 // pred_check_branch
          %349 = sbr.rel (%p347) target = $region36
        $region35: #{tpu_custom_call.1} parent=11 // pred_region
          %s351 = ssub.s32 16, 16
          %352 = vsyncadd [#allocation17], %s351
          %s354 = sshll.u32 [#allocation18], 4
          %s355 = int_to_ptr.vmem [resolvable:$true] %s354
          %357 = dma.hbm_to_vmem [thread:$0]  %s8, 16, %s355, [#allocation17]
        $region36: #{tpu_custom_call.1} parent=11 // pred_fallthru
          _
      $region12: #{tpu_custom_call.1} parent=5 // pred_fallthru
        _
      %p358 = scmp.lt.s32.totalorder %s27, 2
      // Predicated region
      $region37: #{tpu_custom_call.1} parent=5 // pred_check
        %p359 = pneg %p358
      $region38: #{tpu_custom_call.1} parent=5 // pred_check_branch
        %361 = sbr.rel (%p359) target = $region40
      $region39: #{tpu_custom_call.1} parent=5 // pred_region
        // Predicated region
        $region41: #{tpu_custom_call.1} parent=39 // pred_check
          %p362 = pneg %p59
        $region42: #{tpu_custom_call.1} parent=39 // pred_check_branch
          %364 = sbr.rel (%p362) target = $region44
        $region43: #{tpu_custom_call.1} parent=39 // pred_region
          %s365 = sand.u32 %s49, 1
          %s366 = scalar_lea.sflag [#allocation5], %s365
          %s367 = sand.u32 %s49, 1
          %s368 = smul.addr %s367, 8
          %s369 = scalar_lea.vmem [#allocation4], %s368
          %s371 = ssub.s32 128, 128
          %372 = vsyncadd %s366, %s371
          %s373 = smul.addr %s34, 128
          %s374 = scalar_lea.hbm %s0, %s373
          %s376 = sshll.u32 %s369, 4
          %s377 = int_to_ptr.vmem [resolvable:$true] %s376
          %379 = dma.hbm_to_vmem [thread:$0]  %s374, 128, %s377, %s366
        $region44: #{tpu_custom_call.1} parent=39 // pred_fallthru
          _
        // Predicated region
        $region45: #{tpu_custom_call.1} parent=39 // pred_check
          %p380 = pneg %p87
        $region46: #{tpu_custom_call.1} parent=39 // pred_check_branch
          %382 = sbr.rel (%p380) target = $region48
        $region47: #{tpu_custom_call.1} parent=39 // pred_region
          %s383 = sand.u32 %s27, 1
          %s384 = scalar_lea.sflag [#allocation8], %s383
          %s385 = sand.u32 %s77, 1
          %s386 = smul.addr %s385, 8
          %s387 = scalar_lea.vmem [#allocation7], %s386
          %s389 = ssub.s32 128, 128
          %390 = vsyncadd %s384, %s389
          %s391 = sadd.s32 %s35, %s34
          %s392 = smul.addr %s391, 128
          %s393 = scalar_lea.hbm %s1, %s392
          %s395 = sshll.u32 %s387, 4
          %s396 = int_to_ptr.vmem [resolvable:$true] %s395
          %398 = dma.hbm_to_vmem [thread:$0]  %s393, 128, %s396, %s384
        $region48: #{tpu_custom_call.1} parent=39 // pred_fallthru
          _
        // Predicated region
        $region49: #{tpu_custom_call.1} parent=39 // pred_check
          %p399 = pneg %p113
        $region50: #{tpu_custom_call.1} parent=39 // pred_check_branch
          %401 = sbr.rel (%p399) target = $region52
        $region51: #{tpu_custom_call.1} parent=39 // pred_region
          %s402 = sand.u32 %s27, 1
          %s403 = scalar_lea.sflag [#allocation8], %s402
          %s404 = sand.u32 %s103, 1
          %s405 = scalar_lea.vmem [#allocation9], %s404
          %s407 = ssub.s32 16, 16
          %408 = vsyncadd %s403, %s407
          %s409 = smul.addr %s34, 16
          %s410 = scalar_lea.hbm %s2, %s409
          %s412 = sshll.u32 %s405, 4
          %s413 = int_to_ptr.vmem [resolvable:$true] %s412
          %415 = dma.hbm_to_vmem [thread:$0]  %s410, 16, %s413, %s403
        $region52: #{tpu_custom_call.1} parent=39 // pred_fallthru
          _
      $region40: #{tpu_custom_call.1} parent=5 // pred_fallthru
        _
      %p416 = scmp.le.s32.totalorder 1, %s27
      %p417 = scmp.lt.s32.totalorder %s27, 3
      %p418 = pnand %p416, %p417
      %p419 = pneg %p418
      // Predicated region
      $region53: #{tpu_custom_call.1} parent=5 // pred_check
        _
      $region54: #{tpu_custom_call.1} parent=5 // pred_check_branch
        %421 = sbr.rel (%p418) target = $region56
      $region55: #{tpu_custom_call.1} parent=5 // pred_region
        %s422 = ssub.s32 %s27, 1
        %s423 = sand.u32 %s52, 1
        %s424 = scalar_lea.sflag [#allocation5], %s423
        %s425 = sand.u32 %s52, 1
        %s426 = smul.addr %s425, 8
        %s427 = scalar_lea.vmem [#allocation4], %s426
        // Predicated region
        $region57: #{tpu_custom_call.1} parent=55 // pred_check
          %p428 = pneg %p65
        $region58: #{tpu_custom_call.1} parent=55 // pred_check_branch
          %430 = sbr.rel (%p428) target = $region60
        $region59: #{tpu_custom_call.1} parent=55 // pred_region
          %431 = dma.done %s424, 128
        $region60: #{tpu_custom_call.1} parent=55 // pred_fallthru
          _
        %s432 = sand.u32 %s32, 1
        %s433 = scalar_lea.sflag [#allocation8], %s432
        %s434 = sand.u32 %s80, 1
        %s435 = smul.addr %s434, 8
        %s436 = scalar_lea.vmem [#allocation7], %s435
        // Predicated region
        $region61: #{tpu_custom_call.1} parent=55 // pred_check
          %p437 = pneg %p93
        $region62: #{tpu_custom_call.1} parent=55 // pred_check_branch
          %439 = sbr.rel (%p437) target = $region64
        $region63: #{tpu_custom_call.1} parent=55 // pred_region
          %440 = dma.done %s433, 128
        $region64: #{tpu_custom_call.1} parent=55 // pred_fallthru
          _
        %s441 = sand.u32 %s32, 1
        %s442 = scalar_lea.sflag [#allocation8], %s441
        %s443 = sand.u32 %s106, 1
        %s444 = scalar_lea.vmem [#allocation9], %s443
        // Predicated region
        $region65: #{tpu_custom_call.1} parent=55 // pred_check
          %p445 = pneg %p119
        $region66: #{tpu_custom_call.1} parent=55 // pred_check_branch
          %447 = sbr.rel (%p445) target = $region68
        $region67: #{tpu_custom_call.1} parent=55 // pred_region
          %448 = dma.done %s442, 16
        $region68: #{tpu_custom_call.1} parent=55 // pred_fallthru
          _
        // Predicated region
        $region69: #{tpu_custom_call.1} parent=55 // pred_check
          %p449 = pneg %p140
        $region70: #{tpu_custom_call.1} parent=55 // pred_check_branch
          %451 = sbr.rel (%p449) target = $region72
        $region71: #{tpu_custom_call.1} parent=55 // pred_region
          %452 = dma.done [#allocation11], 256
        $region72: #{tpu_custom_call.1} parent=55 // pred_fallthru
          _
        // Predicated region
        $region73: #{tpu_custom_call.1} parent=55 // pred_check
          %p453 = pneg %p161
        $region74: #{tpu_custom_call.1} parent=55 // pred_check_branch
          %455 = sbr.rel (%p453) target = $region76
        $region75: #{tpu_custom_call.1} parent=55 // pred_region
          %456 = dma.done [#allocation11], 16
        $region76: #{tpu_custom_call.1} parent=55 // pred_fallthru
          _
        // Predicated region
        $region77: #{tpu_custom_call.1} parent=55 // pred_check
          %p457 = pneg %p182
        $region78: #{tpu_custom_call.1} parent=55 // pred_check_branch
          %459 = sbr.rel (%p457) target = $region80
        $region79: #{tpu_custom_call.1} parent=55 // pred_region
          %460 = dma.done [#allocation14], 256
        $region80: #{tpu_custom_call.1} parent=55 // pred_fallthru
          _
        // Predicated region
        $region81: #{tpu_custom_call.1} parent=55 // pred_check
          %p461 = pneg %p203
        $region82: #{tpu_custom_call.1} parent=55 // pred_check_branch
          %463 = sbr.rel (%p461) target = $region84
        $region83: #{tpu_custom_call.1} parent=55 // pred_region
          %464 = dma.done [#allocation14], 16
        $region84: #{tpu_custom_call.1} parent=55 // pred_fallthru
          _
        // Predicated region
        $region85: #{tpu_custom_call.1} parent=55 // pred_check
          %p465 = pneg %p224
        $region86: #{tpu_custom_call.1} parent=55 // pred_check_branch
          %467 = sbr.rel (%p465) target = $region88
        $region87: #{tpu_custom_call.1} parent=55 // pred_region
          %468 = dma.done [#allocation17], 16
        $region88: #{tpu_custom_call.1} parent=55 // pred_fallthru
          _
        // Predicated region
        $region89: #{tpu_custom_call.1} parent=55 // pred_check
          %p469 = pneg %p245
        $region90: #{tpu_custom_call.1} parent=55 // pred_check_branch
          %471 = sbr.rel (%p469) target = $region92
        $region91: #{tpu_custom_call.1} parent=55 // pred_region
          %472 = dma.done [#allocation17], 16
        $region92: #{tpu_custom_call.1} parent=55 // pred_fallthru
          _
        %s473 = sand.u32 %s52, 1
        %s474 = scalar_lea.sflag [#allocation5], %s473
        %s475 = sand.u32 %s52, 1
        %s476 = smul.addr %s475, 8
        %s477 = scalar_lea.vmem [#allocation4], %s476
        %p478 = pneg %p65
        %p479 = pneg %p62
        %s480 = sand.u32 %s32, 1
        %s481 = scalar_lea.sflag [#allocation8], %s480
        %s482 = sand.u32 %s80, 1
        %s483 = smul.addr %s482, 8
        %s484 = scalar_lea.vmem [#allocation7], %s483
        %p485 = pneg %p93
        %p486 = pneg %p90
        %s487 = sand.u32 %s32, 1
        %s488 = scalar_lea.sflag [#allocation8], %s487
        %s489 = sand.u32 %s106, 1
        %s490 = scalar_lea.vmem [#allocation9], %s489
        %p491 = pneg %p119
        %p492 = pneg %p116
        %p493 = pneg %p140
        %p494 = pneg %p137
        %p495 = pneg %p161
        %p496 = pneg %p158
        %p497 = pneg %p182
        %p498 = pneg %p179
        %p499 = pneg %p203
        %p500 = pneg %p200
        %p501 = pneg %p224
        %p502 = pneg %p221
        %p503 = pneg %p245
        %p504 = pneg %p242
        %p505 = pneg %p273
        %p506 = pneg %p270
        %s507 = sand.u32 %s260, 1
        %s508 = scalar_lea.sflag [#allocation6], %s507
        %s509 = sand.u32 %s260, 1
        %s510 = smul.addr %s509, 8
        %s511 = scalar_lea.vmem [#allocation19], %s510
        %p513 = scmp.eq.s32.totalorder %s37, 0
        // Predicated region
        $region93: #{tpu_custom_call.1} parent=55 // pred_check
          %p514 = pneg %p513
        $region94: #{tpu_custom_call.1} parent=55 // pred_check_branch
          %516 = sbr.rel (%p514) target = $region96
        $region95: #{tpu_custom_call.1} parent=55 // pred_region
          %v517 = vld [vmem:[%s427] sm:$0xff]
          %v518 = vpack.c.bf16 %v517, %v517
          %v519 = vld [vmem:[#allocation10] sm:$0xf]
          %v520 = vld [vmem:[#allocation10 + $0x4] sm:$0xf]
          %v521 = vld [vmem:[#allocation10 + $0x8] sm:$0xf]
          %v522 = vld [vmem:[#allocation10 + $0xc] sm:$0xf]
          %v523 = vld [vmem:[#allocation12] sm:$0x1]
          %v525 = vlaneseq
          %v526 = vshrl.u32 %v525, 7
          %v527 = vsub.s32 0, %v526
          %v528 = vrot.slane %v523, %v527
          %v534 = vunpack.c.l.b16 %v519
          %v535 = vunpack.c.l.b16 %v520
          %v536 = vunpack.c.l.b16 %v521
          %v537 = vunpack.c.l.b16 %v522
          %v538 = vpack.c.b16 %v535, %v534
          %v539 = vpack.c.b16 %v537, %v536
          %vm542 = vcmask 261120
          %v544 = vsel %vm542, %v518, 0
          %546 = vmatprep.subr.bf16.mxu0 0
          %547 = vmatpush1.bf16.msra.mxu0 %v538
          %548 = vmatprep.subr.bf16.mxu0 0
          %549 = vmatpush1.bf16.msra.mxu0 %v539
          %550 = vmatprep.subr.bf16.mxu0 0
          %551 = vmatpush1.bf16.msra.mxu0 0
          %552 = vmatprep.subr.bf16.mxu0 0
          %553 = vmatpush1.bf16.msra.mxu0 0
          %554 = vmatprep.subr.bf16.mxu0 0
          %555 = vmatpush1.bf16.msra.mxu0 0
          %556 = vmatprep.subr.bf16.mxu0 0
          %557 = vmatpush1.bf16.msra.mxu0 0
          %558 = vmatprep.subr.bf16.mxu0 0
          %559 = vmatpush1.bf16.msra.mxu0 0
          %560 = vmatprep.subr.bf16.mxu0 0
          %561 = vmatpush1.bf16.msra.mxu0 0
          %562 = vmatprep.subr.bf16.mxu0 0
          %563 = vmatpush1.bf16.msra.mxu0 0
          %564 = vmatprep.subr.bf16.mxu0 0
          %565 = vmatpush1.bf16.msra.mxu0 0
          %566 = vmatprep.subr.bf16.mxu0 0
          %567 = vmatpush1.bf16.msra.mxu0 0
          %568 = vmatprep.subr.bf16.mxu0 0
          %569 = vmatpush1.bf16.msra.mxu0 0
          %570 = vmatprep.subr.bf16.mxu0 0
          %571 = vmatpush1.bf16.msra.mxu0 0
          %572 = vmatprep.subr.bf16.mxu0 0
          %573 = vmatpush1.bf16.msra.mxu0 0
          %574 = vmatprep.subr.bf16.mxu0 0
          %575 = vmatpush1.bf16.msra.mxu0 0
          %576 = vmatprep.subr.bf16.mxu0 0
          %577 = vmatpush1.bf16.msra.mxu0 0
          %578 = vmatprep.mubr.bf16.mxu0 0
          %579 = vmatmul.mubr.bf16.gmra.mrb[0].mxu0 %v544
          %v580 = vpop.f32.mrb[0].mxu0
          %v581 = vadd.f32 %v528, %v580
          %v582 = vpop.f32.mrb[0].mxu0
          %v583 = vpop.f32.mrb[0].mxu0
          %v584 = vpop.f32.mrb[0].mxu0
          %585 = vdwg.mxu0
          %v586 = vpack.c.bf16 %v581, %v581
          %vm587 = vcmask 257024
          %588 = vst.msk [vmem:[#allocation2] sm:$0xf] %vm587, %v586
          %590 = vrot.lane.b32.xlu0 %v581, 96
          %v591 = vpop.permute.xlu0 %590
          %593 = vxpose.xlu0.b32.start [1/16] %v591, 128
          %594 = vxpose.xlu0.b32.cont [2/16] 0.0, 128
          %595 = vxpose.xlu0.b32.cont [3/16] 0.0, 128
          %596 = vxpose.xlu0.b32.cont [4/16] 0.0, 128
          %597 = vxpose.xlu0.b32.cont [5/16] 0.0, 128
          %598 = vxpose.xlu0.b32.cont [6/16] 0.0, 128
          %599 = vxpose.xlu0.b32.cont [7/16] 0.0, 128
          %600 = vxpose.xlu0.b32.cont [8/16] 0.0, 128
          %601 = vxpose.xlu0.b32.cont [9/16] 0.0, 128
          %602 = vxpose.xlu0.b32.cont [10/16] 0.0, 128
          %603 = vxpose.xlu0.b32.cont [11/16] 0.0, 128
          %604 = vxpose.xlu0.b32.cont [12/16] 0.0, 128
          %605 = vxpose.xlu0.b32.cont [13/16] 0.0, 128
          %606 = vxpose.xlu0.b32.cont [14/16] 0.0, 128
          %607 = vxpose.xlu0.b32.cont [15/16] 0.0, 128
          %608 = vxpose.xlu0.b32.end [16/16] 0.0, 128
          %v609 = vpop.trf.xlu0
          %v610 = vpop.trf.xlu0
          %v611 = vpop.trf.xlu0
          %v612 = vpop.trf.xlu0
          %v613 = vpop.trf.xlu0
          %v614 = vpop.trf.xlu0
          %v615 = vpop.trf.xlu0
          %v616 = vpop.trf.xlu0
          %v617 = vpop.trf.xlu0
          %v618 = vpop.trf.xlu0
          %v619 = vpop.trf.xlu0
          %v620 = vpop.trf.xlu0
          %v621 = vpop.trf.xlu0
          %v622 = vpop.trf.xlu0
          %v623 = vpop.trf.xlu0
          %v624 = vpop.trf.xlu0
          %v625 = vpack.c.bf16 %v610, %v609
          %v626 = vpack.c.bf16 %v612, %v611
          %v627 = vpack.c.bf16 %v614, %v613
          %v628 = vpack.c.bf16 %v616, %v615
          %v633 = vunpack.c.l.b16 %v625
          %v634 = vunpack.c.h.b16 %v625
          %v635 = vunpack.c.l.b16 %v626
          %v636 = vunpack.c.h.b16 %v626
          %v637 = vunpack.c.l.b16 %v627
          %v638 = vunpack.c.h.b16 %v627
          %v639 = vunpack.c.l.b16 %v628
          %v640 = vunpack.c.h.b16 %v628
          %v641 = vpack.c.b16 %v633, %v633
          %v642 = vpack.c.b16 %v634, %v634
          %v643 = vpack.c.b16 %v635, %v635
          %v644 = vpack.c.b16 %v636, %v636
          %v645 = vpack.c.b16 %v637, %v637
          %v646 = vpack.c.b16 %v638, %v638
          %v647 = vpack.c.b16 %v639, %v639
          %v648 = vpack.c.b16 %v640, %v640
          %vm657 = vcmask 60416
          %658 = vst.msk [vmem:[#allocation3] sm:$0xf] %vm657, %v641
          %659 = vst.msk [vmem:[#allocation3 + $0x4] sm:$0xf] %vm657, %v642
          %660 = vst.msk [vmem:[#allocation3 + $0x8] sm:$0xf] %vm657, %v643
          %661 = vst.msk [vmem:[#allocation3 + $0xc] sm:$0xf] %vm657, %v644
          %662 = vst.msk [vmem:[#allocation3 + $0x10] sm:$0xf] %vm657, %v645
          %663 = vst.msk [vmem:[#allocation3 + $0x14] sm:$0xf] %vm657, %v646
          %664 = vst.msk [vmem:[#allocation3 + $0x18] sm:$0xf] %vm657, %v647
          %665 = vst.msk [vmem:[#allocation3 + $0x1c] sm:$0xf] %vm657, %v648
        $region96: #{tpu_custom_call.1} parent=55 // pred_fallthru
          _
        %s666 = smul.u32 %s37, 8
        %s667 = sshra.s32 %s666, 3
        %s668 = sand.u32 %s666, 7
        %s669 = smul.addr %s667, 4
        %s670 = scalar_lea.vmem [#allocation2], %s669
        %v671 = vld [vmem:[%s670] sm:$0xf]
        %v672 = vunpack.c.l.bf16 %v671
        %673 = vxpose.xlu0.b32.start [1/16] %v672, 128
        %674 = vxpose.xlu0.b32.cont [2/16] 0.0, 128
        %675 = vxpose.xlu0.b32.cont [3/16] 0.0, 128
        %676 = vxpose.xlu0.b32.cont [4/16] 0.0, 128
        %677 = vxpose.xlu0.b32.cont [5/16] 0.0, 128
        %678 = vxpose.xlu0.b32.cont [6/16] 0.0, 128
        %679 = vxpose.xlu0.b32.cont [7/16] 0.0, 128
        %680 = vxpose.xlu0.b32.cont [8/16] 0.0, 128
        %681 = vxpose.xlu0.b32.cont [9/16] 0.0, 128
        %682 = vxpose.xlu0.b32.cont [10/16] 0.0, 128
        %683 = vxpose.xlu0.b32.cont [11/16] 0.0, 128
        %684 = vxpose.xlu0.b32.cont [12/16] 0.0, 128
        %685 = vxpose.xlu0.b32.cont [13/16] 0.0, 128
        %686 = vxpose.xlu0.b32.cont [14/16] 0.0, 128
        %687 = vxpose.xlu0.b32.cont [15/16] 0.0, 128
        %688 = vxpose.xlu0.b32.end [16/16] 0.0, 128
        %v689 = vpop.trf.xlu0
        %v690 = vpop.trf.xlu0
        %v691 = vpop.trf.xlu0
        %v692 = vpop.trf.xlu0
        %v693 = vpop.trf.xlu0
        %v694 = vpop.trf.xlu0
        %v695 = vpop.trf.xlu0
        %v696 = vpop.trf.xlu0
        %v697 = vpop.trf.xlu0
        %v698 = vpop.trf.xlu0
        %v699 = vpop.trf.xlu0
        %v700 = vpop.trf.xlu0
        %v701 = vpop.trf.xlu0
        %v702 = vpop.trf.xlu0
        %v703 = vpop.trf.xlu0
        %v704 = vpop.trf.xlu0
        %705 = vxpose.xlu0.b32.start [1/16] %v689, 128
        %706 = vxpose.xlu0.b32.cont [2/16] 0.0, 128
        %707 = vxpose.xlu0.b32.cont [3/16] 0.0, 128
        %708 = vxpose.xlu0.b32.cont [4/16] 0.0, 128
        %709 = vxpose.xlu0.b32.cont [5/16] 0.0, 128
        %710 = vxpose.xlu0.b32.cont [6/16] 0.0, 128
        %711 = vxpose.xlu0.b32.cont [7/16] 0.0, 128
        %712 = vxpose.xlu0.b32.cont [8/16] 0.0, 128
        %713 = vxpose.xlu0.b32.cont [9/16] 0.0, 128
        %714 = vxpose.xlu0.b32.cont [10/16] 0.0, 128
        %715 = vxpose.xlu0.b32.cont [11/16] 0.0, 128
        %716 = vxpose.xlu0.b32.cont [12/16] 0.0, 128
        %717 = vxpose.xlu0.b32.cont [13/16] 0.0, 128
        %718 = vxpose.xlu0.b32.cont [14/16] 0.0, 128
        %719 = vxpose.xlu0.b32.cont [15/16] 0.0, 128
        %720 = vxpose.xlu0.b32.end [16/16] 0.0, 128
        %v721 = vpop.trf.xlu0
        %v722 = vpop.trf.xlu0
        %v723 = vpop.trf.xlu0
        %v724 = vpop.trf.xlu0
        %v725 = vpop.trf.xlu0
        %v726 = vpop.trf.xlu0
        %v727 = vpop.trf.xlu0
        %v728 = vpop.trf.xlu0
        %v729 = vpop.trf.xlu0
        %v730 = vpop.trf.xlu0
        %v731 = vpop.trf.xlu0
        %v732 = vpop.trf.xlu0
        %v733 = vpop.trf.xlu0
        %v734 = vpop.trf.xlu0
        %v735 = vpop.trf.xlu0
        %v736 = vpop.trf.xlu0
        %737 = vxpose.xlu0.b32.start [1/16] %v690, 128
        %738 = vxpose.xlu0.b32.cont [2/16] 0.0, 128
        %739 = vxpose.xlu0.b32.cont [3/16] 0.0, 128
        %740 = vxpose.xlu0.b32.cont [4/16] 0.0, 128
        %741 = vxpose.xlu0.b32.cont [5/16] 0.0, 128
        %742 = vxpose.xlu0.b32.cont [6/16] 0.0, 128
        %743 = vxpose.xlu0.b32.cont [7/16] 0.0, 128
        %744 = vxpose.xlu0.b32.cont [8/16] 0.0, 128
        %745 = vxpose.xlu0.b32.cont [9/16] 0.0, 128
        %746 = vxpose.xlu0.b32.cont [10/16] 0.0, 128
        %747 = vxpose.xlu0.b32.cont [11/16] 0.0, 128
        %748 = vxpose.xlu0.b32.cont [12/16] 0.0, 128
        %749 = vxpose.xlu0.b32.cont [13/16] 0.0, 128
        %750 = vxpose.xlu0.b32.cont [14/16] 0.0, 128
        %751 = vxpose.xlu0.b32.cont [15/16] 0.0, 128
        %752 = vxpose.xlu0.b32.end [16/16] 0.0, 128
        %v753 = vpop.trf.xlu0
        %v754 = vpop.trf.xlu0
        %v755 = vpop.trf.xlu0
        %v756 = vpop.trf.xlu0
        %v757 = vpop.trf.xlu0
        %v758 = vpop.trf.xlu0
        %v759 = vpop.trf.xlu0
        %v760 = vpop.trf.xlu0
        %v761 = vpop.trf.xlu0
        %v762 = vpop.trf.xlu0
        %v763 = vpop.trf.xlu0
        %v764 = vpop.trf.xlu0
        %v765 = vpop.trf.xlu0
        %v766 = vpop.trf.xlu0
        %v767 = vpop.trf.xlu0
        %v768 = vpop.trf.xlu0
        %769 = vxpose.xlu0.b32.start [1/16] %v691, 128
        %770 = vxpose.xlu0.b32.cont [2/16] 0.0, 128
        %771 = vxpose.xlu0.b32.cont [3/16] 0.0, 128
        %772 = vxpose.xlu0.b32.cont [4/16] 0.0, 128
        %773 = vxpose.xlu0.b32.cont [5/16] 0.0, 128
        %774 = vxpose.xlu0.b32.cont [6/16] 0.0, 128
        %775 = vxpose.xlu0.b32.cont [7/16] 0.0, 128
        %776 = vxpose.xlu0.b32.cont [8/16] 0.0, 128
        %777 = vxpose.xlu0.b32.cont [9/16] 0.0, 128
        %778 = vxpose.xlu0.b32.cont [10/16] 0.0, 128
        %779 = vxpose.xlu0.b32.cont [11/16] 0.0, 128
        %780 = vxpose.xlu0.b32.cont [12/16] 0.0, 128
        %781 = vxpose.xlu0.b32.cont [13/16] 0.0, 128
        %782 = vxpose.xlu0.b32.cont [14/16] 0.0, 128
        %783 = vxpose.xlu0.b32.cont [15/16] 0.0, 128
        %784 = vxpose.xlu0.b32.end [16/16] 0.0, 128
        %v785 = vpop.trf.xlu0
        %v786 = vpop.trf.xlu0
        %v787 = vpop.trf.xlu0
        %v788 = vpop.trf.xlu0
        %v789 = vpop.trf.xlu0
        %v790 = vpop.trf.xlu0
        %v791 = vpop.trf.xlu0
        %v792 = vpop.trf.xlu0
        %v793 = vpop.trf.xlu0
        %v794 = vpop.trf.xlu0
        %v795 = vpop.trf.xlu0
        %v796 = vpop.trf.xlu0
        %v797 = vpop.trf.xlu0
        %v798 = vpop.trf.xlu0
        %v799 = vpop.trf.xlu0
        %v800 = vpop.trf.xlu0
        %801 = vxpose.xlu0.b32.start [1/16] %v692, 128
        %802 = vxpose.xlu0.b32.cont [2/16] 0.0, 128
        %803 = vxpose.xlu0.b32.cont [3/16] 0.0, 128
        %804 = vxpose.xlu0.b32.cont [4/16] 0.0, 128
        %805 = vxpose.xlu0.b32.cont [5/16] 0.0, 128
        %806 = vxpose.xlu0.b32.cont [6/16] 0.0, 128
        %807 = vxpose.xlu0.b32.cont [7/16] 0.0, 128
        %808 = vxpose.xlu0.b32.cont [8/16] 0.0, 128
        %809 = vxpose.xlu0.b32.cont [9/16] 0.0, 128
        %810 = vxpose.xlu0.b32.cont [10/16] 0.0, 128
        %811 = vxpose.xlu0.b32.cont [11/16] 0.0, 128
        %812 = vxpose.xlu0.b32.cont [12/16] 0.0, 128
        %813 = vxpose.xlu0.b32.cont [13/16] 0.0, 128
        %814 = vxpose.xlu0.b32.cont [14/16] 0.0, 128
        %815 = vxpose.xlu0.b32.cont [15/16] 0.0, 128
        %816 = vxpose.xlu0.b32.end [16/16] 0.0, 128
        %v817 = vpop.trf.xlu0
        %v818 = vpop.trf.xlu0
        %v819 = vpop.trf.xlu0
        %v820 = vpop.trf.xlu0
        %v821 = vpop.trf.xlu0
        %v822 = vpop.trf.xlu0
        %v823 = vpop.trf.xlu0
        %v824 = vpop.trf.xlu0
        %v825 = vpop.trf.xlu0
        %v826 = vpop.trf.xlu0
        %v827 = vpop.trf.xlu0
        %v828 = vpop.trf.xlu0
        %v829 = vpop.trf.xlu0
        %v830 = vpop.trf.xlu0
        %v831 = vpop.trf.xlu0
        %v832 = vpop.trf.xlu0
        %v833 = vpack.c.bf16 %v721, %v721
        %v834 = vpack.c.bf16 %v753, %v753
        %v835 = vpack.c.bf16 %v785, %v785
        %v836 = vpack.c.bf16 %v817, %v817
        %v837 = vld [vmem:[#allocation3] sm:$0xf]
        %v838 = vld [vmem:[#allocation3 + $0x4] sm:$0xf]
        %v839 = vld [vmem:[#allocation3 + $0x8] sm:$0xf]
        %v840 = vld [vmem:[#allocation3 + $0xc] sm:$0xf]
        %s841 = scalar_lea.vmem [#allocation3], 16
        %v842 = vld [vmem:[%s841] sm:$0xf]
        %v843 = vld [vmem:[%s841 + $0x4] sm:$0xf]
        %v844 = vld [vmem:[%s841 + $0x8] sm:$0xf]
        %v845 = vld [vmem:[%s841 + $0xc] sm:$0xf]
        %v846 = vld [vmem:[%s444] sm:$0x1]
        %v847 = vmul.f32 %v846, -1e+30
        %v849 = vlaneseq
        %v850 = vshrl.u32 %v849, 7
        %v851 = vsub.s32 0, %v850
        %v852 = vrot.slane %v847, %v851
        %vm854 = vcmask 64512
        %v856 = vsel %vm854, %v833, 0
        %vm858 = vcmask 1043456
        %v860 = vsel %vm858, %v837, 0
        %862 = vmatprep.subr.bf16.mxu0 0
        %863 = vmatpush1.bf16.msra.mxu0 %v860
        %864 = vmatprep.subr.bf16.mxu0 0
        %865 = vmatpush1.bf16.msra.mxu0 0
        %866 = vmatprep.subr.bf16.mxu0 0
        %867 = vmatpush1.bf16.msra.mxu0 0
        %868 = vmatprep.subr.bf16.mxu0 0
        %869 = vmatpush1.bf16.msra.mxu0 0
        %870 = vmatprep.subr.bf16.mxu0 0
        %871 = vmatpush1.bf16.msra.mxu0 0
        %872 = vmatprep.subr.bf16.mxu0 0
        %873 = vmatpush1.bf16.msra.mxu0 0
        %874 = vmatprep.subr.bf16.mxu0 0
        %875 = vmatpush1.bf16.msra.mxu0 0
        %876 = vmatprep.subr.bf16.mxu0 0
        %877 = vmatpush1.bf16.msra.mxu0 0
        %878 = vmatprep.subr.bf16.mxu0 0
        %879 = vmatpush1.bf16.msra.mxu0 0
        %880 = vmatprep.subr.bf16.mxu0 0
        %881 = vmatpush1.bf16.msra.mxu0 0
        %882 = vmatprep.subr.bf16.mxu0 0
        %883 = vmatpush1.bf16.msra.mxu0 0
        %884 = vmatprep.subr.bf16.mxu0 0
        %885 = vmatpush1.bf16.msra.mxu0 0
        %886 = vmatprep.subr.bf16.mxu0 0
        %887 = vmatpush1.bf16.msra.mxu0 0
        %888 = vmatprep.subr.bf16.mxu0 0
        %889 = vmatpush1.bf16.msra.mxu0 0
        %890 = vmatprep.subr.bf16.mxu0 0
        %891 = vmatpush1.bf16.msra.mxu0 0
        %892 = vmatprep.subr.bf16.mxu0 0
        %893 = vmatpush1.bf16.msra.mxu0 0
        %894 = vmatprep.mubr.bf16.mxu0 0
        %895 = vmatmul.mubr.bf16.gmra.mrb[0].mxu0 %v856
        %v896 = vpop.f32.mrb[0].mxu0
        %v897 = vadd.f32 %v852, %v896
        %v898 = vpop.f32.mrb[0].mxu0
        %v899 = vpop.f32.mrb[0].mxu0
        %v900 = vpop.f32.mrb[0].mxu0
        %901 = vdwg.mxu0
        %v903 = vsel %vm854, %v834, 0
        %v906 = vsel %vm858, %v838, 0
        %908 = vmatprep.subr.bf16.mxu0 0
        %909 = vmatpush1.bf16.msra.mxu0 %v906
        %910 = vmatprep.subr.bf16.mxu0 0
        %911 = vmatpush1.bf16.msra.mxu0 0
        %912 = vmatprep.subr.bf16.mxu0 0
        %913 = vmatpush1.bf16.msra.mxu0 0
        %914 = vmatprep.subr.bf16.mxu0 0
        %915 = vmatpush1.bf16.msra.mxu0 0
        %916 = vmatprep.subr.bf16.mxu0 0
        %917 = vmatpush1.bf16.msra.mxu0 0
        %918 = vmatprep.subr.bf16.mxu0 0
        %919 = vmatpush1.bf16.msra.mxu0 0
        %920 = vmatprep.subr.bf16.mxu0 0
        %921 = vmatpush1.bf16.msra.mxu0 0
        %922 = vmatprep.subr.bf16.mxu0 0
        %923 = vmatpush1.bf16.msra.mxu0 0
        %924 = vmatprep.subr.bf16.mxu0 0
        %925 = vmatpush1.bf16.msra.mxu0 0
        %926 = vmatprep.subr.bf16.mxu0 0
        %927 = vmatpush1.bf16.msra.mxu0 0
        %928 = vmatprep.subr.bf16.mxu0 0
        %929 = vmatpush1.bf16.msra.mxu0 0
        %930 = vmatprep.subr.bf16.mxu0 0
        %931 = vmatpush1.bf16.msra.mxu0 0
        %932 = vmatprep.subr.bf16.mxu0 0
        %933 = vmatpush1.bf16.msra.mxu0 0
        %934 = vmatprep.subr.bf16.mxu0 0
        %935 = vmatpush1.bf16.msra.mxu0 0
        %936 = vmatprep.subr.bf16.mxu0 0
        %937 = vmatpush1.bf16.msra.mxu0 0
        %938 = vmatprep.subr.bf16.mxu0 0
        %939 = vmatpush1.bf16.msra.mxu0 0
        %940 = vmatprep.mubr.bf16.mxu0 0
        %941 = vmatmul.mubr.bf16.gmra.mrb[0].mxu0 %v903
        %v942 = vpop.f32.mrb[0].mxu0
        %v943 = vadd.f32 %v852, %v942
        %v944 = vpop.f32.mrb[0].mxu0
        %v945 = vpop.f32.mrb[0].mxu0
        %v946 = vpop.f32.mrb[0].mxu0
        %947 = vdwg.mxu0
        %v949 = vsel %vm854, %v835, 0
        %v952 = vsel %vm858, %v839, 0
        %954 = vmatprep.subr.bf16.mxu0 0
        %955 = vmatpush1.bf16.msra.mxu0 %v952
        %956 = vmatprep.subr.bf16.mxu0 0
        %957 = vmatpush1.bf16.msra.mxu0 0
        %958 = vmatprep.subr.bf16.mxu0 0
        %959 = vmatpush1.bf16.msra.mxu0 0
        %960 = vmatprep.subr.bf16.mxu0 0
        %961 = vmatpush1.bf16.msra.mxu0 0
        %962 = vmatprep.subr.bf16.mxu0 0
        %963 = vmatpush1.bf16.msra.mxu0 0
        %964 = vmatprep.subr.bf16.mxu0 0
        %965 = vmatpush1.bf16.msra.mxu0 0
        %966 = vmatprep.subr.bf16.mxu0 0
        %967 = vmatpush1.bf16.msra.mxu0 0
        %968 = vmatprep.subr.bf16.mxu0 0
        %969 = vmatpush1.bf16.msra.mxu0 0
        %970 = vmatprep.subr.bf16.mxu0 0
        %971 = vmatpush1.bf16.msra.mxu0 0
        %972 = vmatprep.subr.bf16.mxu0 0
        %973 = vmatpush1.bf16.msra.mxu0 0
        %974 = vmatprep.subr.bf16.mxu0 0
        %975 = vmatpush1.bf16.msra.mxu0 0
        %976 = vmatprep.subr.bf16.mxu0 0
        %977 = vmatpush1.bf16.msra.mxu0 0
        %978 = vmatprep.subr.bf16.mxu0 0
        %979 = vmatpush1.bf16.msra.mxu0 0
        %980 = vmatprep.subr.bf16.mxu0 0
        %981 = vmatpush1.bf16.msra.mxu0 0
        %982 = vmatprep.subr.bf16.mxu0 0
        %983 = vmatpush1.bf16.msra.mxu0 0
        %984 = vmatprep.subr.bf16.mxu0 0
        %985 = vmatpush1.bf16.msra.mxu0 0
        %986 = vmatprep.mubr.bf16.mxu0 0
        %987 = vmatmul.mubr.bf16.gmra.mrb[0].mxu0 %v949
        %v988 = vpop.f32.mrb[0].mxu0
        %v989 = vadd.f32 %v852, %v988
        %v990 = vpop.f32.mrb[0].mxu0
        %v991 = vpop.f32.mrb[0].mxu0
        %v992 = vpop.f32.mrb[0].mxu0
        %993 = vdwg.mxu0
        %v995 = vsel %vm854, %v836, 0
        %v998 = vsel %vm858, %v840, 0
        %1000 = vmatprep.subr.bf16.mxu0 0
        %1001 = vmatpush1.bf16.msra.mxu0 %v998
        %1002 = vmatprep.subr.bf16.mxu0 0
        %1003 = vmatpush1.bf16.msra.mxu0 0
        %1004 = vmatprep.subr.bf16.mxu0 0
        %1005 = vmatpush1.bf16.msra.mxu0 0
        %1006 = vmatprep.subr.bf16.mxu0 0
        %1007 = vmatpush1.bf16.msra.mxu0 0
        %1008 = vmatprep.subr.bf16.mxu0 0
        %1009 = vmatpush1.bf16.msra.mxu0 0
        %1010 = vmatprep.subr.bf16.mxu0 0
        %1011 = vmatpush1.bf16.msra.mxu0 0
        %1012 = vmatprep.subr.bf16.mxu0 0
        %1013 = vmatpush1.bf16.msra.mxu0 0
        %1014 = vmatprep.subr.bf16.mxu0 0
        %1015 = vmatpush1.bf16.msra.mxu0 0
        %1016 = vmatprep.subr.bf16.mxu0 0
        %1017 = vmatpush1.bf16.msra.mxu0 0
        %1018 = vmatprep.subr.bf16.mxu0 0
        %1019 = vmatpush1.bf16.msra.mxu0 0
        %1020 = vmatprep.subr.bf16.mxu0 0
        %1021 = vmatpush1.bf16.msra.mxu0 0
        %1022 = vmatprep.subr.bf16.mxu0 0
        %1023 = vmatpush1.bf16.msra.mxu0 0
        %1024 = vmatprep.subr.bf16.mxu0 0
        %1025 = vmatpush1.bf16.msra.mxu0 0
        %1026 = vmatprep.subr.bf16.mxu0 0
        %1027 = vmatpush1.bf16.msra.mxu0 0
        %1028 = vmatprep.subr.bf16.mxu0 0
        %1029 = vmatpush1.bf16.msra.mxu0 0
        %1030 = vmatprep.subr.bf16.mxu0 0
        %1031 = vmatpush1.bf16.msra.mxu0 0
        %1032 = vmatprep.mubr.bf16.mxu0 0
        %1033 = vmatmul.mubr.bf16.gmra.mrb[0].mxu0 %v995
        %v1034 = vpop.f32.mrb[0].mxu0
        %v1035 = vadd.f32 %v852, %v1034
        %v1036 = vpop.f32.mrb[0].mxu0
        %v1037 = vpop.f32.mrb[0].mxu0
        %v1038 = vpop.f32.mrb[0].mxu0
        %1039 = vdwg.mxu0
        %v1040 = vsel %vm854, %v897, -inf
        %1041 = vmax.xlane.f32.xlu0 %v1040
        %v1042 = vpop.xlane.xlu0 %1041
        %v1043 = vsel %vm854, %v943, -inf
        %1044 = vmax.xlane.f32.xlu0 %v1043
        %v1045 = vpop.xlane.xlu0 %1044
        %v1046 = vsel %vm854, %v989, -inf
        %1047 = vmax.xlane.f32.xlu0 %v1046
        %v1048 = vpop.xlane.xlu0 %1047
        %v1049 = vsel %vm854, %v1035, -inf
        %1050 = vmax.xlane.f32.xlu0 %v1049
        %v1051 = vpop.xlane.xlu0 %1050
        %v1052 = vsub.f32 %v897, %v1042
        %v1053 = vsub.f32 %v943, %v1045
        %v1054 = vsub.f32 %v989, %v1048
        %v1055 = vsub.f32 %v1035, %v1051
        %v1056 = vmul.f32 %v1052, 1.442695
        %v1057 = vpow.pop %v1056
        %v1058 = vmul.f32 %v1053, 1.442695
        %v1059 = vpow.pop %v1058
        %v1060 = vmul.f32 %v1054, 1.442695
        %v1061 = vpow.pop %v1060
        %v1062 = vmul.f32 %v1055, 1.442695
        %v1063 = vpow.pop %v1062
        %v1064 = vsel %vm854, %v1057, 0.0
        %1065 = vadd.xlane.f32.xlu0 %v1064
        %v1066 = vpop.xlane.xlu0 %1065
        %v1067 = vsel %vm854, %v1059, 0.0
        %1068 = vadd.xlane.f32.xlu0 %v1067
        %v1069 = vpop.xlane.xlu0 %1068
        %v1070 = vsel %vm854, %v1061, 0.0
        %1071 = vadd.xlane.f32.xlu0 %v1070
        %v1072 = vpop.xlane.xlu0 %1071
        %v1073 = vsel %vm854, %v1063, 0.0
        %1074 = vadd.xlane.f32.xlu0 %v1073
        %v1075 = vpop.xlane.xlu0 %1074
        %v1076 = vpack.c.bf16 %v1057, %v1057
        %v1077 = vpack.c.bf16 %v1059, %v1059
        %v1078 = vpack.c.bf16 %v1061, %v1061
        %v1079 = vpack.c.bf16 %v1063, %v1063
        %v1081 = vsel %vm854, %v842, 0
        %v1084 = vsel %vm854, %v1076, 0
        %1086 = vmatprep.subr.bf16.mxu0 0
        %1087 = vmatpush1.bf16.xpose.msra.mxu0 %v1084
        %1088 = vmatprep.subr.bf16.mxu0 0
        %1089 = vmatpush1.bf16.xpose.msra.mxu0 0
        %1090 = vmatprep.subr.bf16.mxu0 0
        %1091 = vmatpush1.bf16.xpose.msra.mxu0 0
        %1092 = vmatprep.subr.bf16.mxu0 0
        %1093 = vmatpush1.bf16.xpose.msra.mxu0 0
        %1094 = vmatprep.subr.bf16.mxu0 0
        %1095 = vmatpush1.bf16.xpose.msra.mxu0 0
        %1096 = vmatprep.subr.bf16.mxu0 0
        %1097 = vmatpush1.bf16.xpose.msra.mxu0 0
        %1098 = vmatprep.subr.bf16.mxu0 0
        %1099 = vmatpush1.bf16.xpose.msra.mxu0 0
        %1100 = vmatprep.subr.bf16.mxu0 0
        %1101 = vmatpush1.bf16.xpose.msra.mxu0 0
        %1102 = vmatprep.subr.bf16.mxu0 0
        %1103 = vmatpush1.bf16.xpose.msra.mxu0 0
        %1104 = vmatprep.subr.bf16.mxu0 0
        %1105 = vmatpush1.bf16.xpose.msra.mxu0 0
        %1106 = vmatprep.subr.bf16.mxu0 0
        %1107 = vmatpush1.bf16.xpose.msra.mxu0 0
        %1108 = vmatprep.subr.bf16.mxu0 0
        %1109 = vmatpush1.bf16.xpose.msra.mxu0 0
        %1110 = vmatprep.subr.bf16.mxu0 0
        %1111 = vmatpush1.bf16.xpose.msra.mxu0 0
        %1112 = vmatprep.subr.bf16.mxu0 0
        %1113 = vmatpush1.bf16.xpose.msra.mxu0 0
        %1114 = vmatprep.subr.bf16.mxu0 0
        %1115 = vmatpush1.bf16.xpose.msra.mxu0 0
        %1116 = vmatprep.subr.bf16.mxu0 0
        %1117 = vmatpush1.bf16.xpose.msra.mxu0 0
        %1118 = vmatprep.mubr.bf16.mxu0 0
        %1119 = vmatmul.mubr.bf16.gmra.mrb[0].mxu0 %v1081
        %v1120 = vpop.f32.mrb[0].mxu0
        %v1121 = vadd.f32 0.0, %v1120
        %v1122 = vpop.f32.mrb[0].mxu0
        %v1123 = vpop.f32.mrb[0].mxu0
        %v1124 = vpop.f32.mrb[0].mxu0
        %1125 = vdwg.mxu0
        %v1127 = vsel %vm854, %v843, 0
        %v1130 = vsel %vm854, %v1077, 0
        %1132 = vmatprep.subr.bf16.mxu0 0
        %1133 = vmatpush1.bf16.xpose.msra.mxu0 %v1130
        %1134 = vmatprep.subr.bf16.mxu0 0
        %1135 = vmatpush1.bf16.xpose.msra.mxu0 0
        %1136 = vmatprep.subr.bf16.mxu0 0
        %1137 = vmatpush1.bf16.xpose.msra.mxu0 0
        %1138 = vmatprep.subr.bf16.mxu0 0
        %1139 = vmatpush1.bf16.xpose.msra.mxu0 0
        %1140 = vmatprep.subr.bf16.mxu0 0
        %1141 = vmatpush1.bf16.xpose.msra.mxu0 0
        %1142 = vmatprep.subr.bf16.mxu0 0
        %1143 = vmatpush1.bf16.xpose.msra.mxu0 0
        %1144 = vmatprep.subr.bf16.mxu0 0
        %1145 = vmatpush1.bf16.xpose.msra.mxu0 0
        %1146 = vmatprep.subr.bf16.mxu0 0
        %1147 = vmatpush1.bf16.xpose.msra.mxu0 0
        %1148 = vmatprep.subr.bf16.mxu0 0
        %1149 = vmatpush1.bf16.xpose.msra.mxu0 0
        %1150 = vmatprep.subr.bf16.mxu0 0
        %1151 = vmatpush1.bf16.xpose.msra.mxu0 0
        %1152 = vmatprep.subr.bf16.mxu0 0
        %1153 = vmatpush1.bf16.xpose.msra.mxu0 0
        %1154 = vmatprep.subr.bf16.mxu0 0
        %1155 = vmatpush1.bf16.xpose.msra.mxu0 0
        %1156 = vmatprep.subr.bf16.mxu0 0
        %1157 = vmatpush1.bf16.xpose.msra.mxu0 0
        %1158 = vmatprep.subr.bf16.mxu0 0
        %1159 = vmatpush1.bf16.xpose.msra.mxu0 0
        %1160 = vmatprep.subr.bf16.mxu0 0
        %1161 = vmatpush1.bf16.xpose.msra.mxu0 0
        %1162 = vmatprep.subr.bf16.mxu0 0
        %1163 = vmatpush1.bf16.xpose.msra.mxu0 0
        %1164 = vmatprep.mubr.bf16.mxu0 0
        %1165 = vmatmul.mubr.bf16.gmra.mrb[0].mxu0 %v1127
        %v1166 = vpop.f32.mrb[0].mxu0
        %v1167 = vadd.f32 0.0, %v1166
        %v1168 = vpop.f32.mrb[0].mxu0
        %v1169 = vpop.f32.mrb[0].mxu0
        %v1170 = vpop.f32.mrb[0].mxu0
        %1171 = vdwg.mxu0
        %v1173 = vsel %vm854, %v844, 0
        %v1176 = vsel %vm854, %v1078, 0
        %1178 = vmatprep.subr.bf16.mxu0 0
        %1179 = vmatpush1.bf16.xpose.msra.mxu0 %v1176
        %1180 = vmatprep.subr.bf16.mxu0 0
        %1181 = vmatpush1.bf16.xpose.msra.mxu0 0
        %1182 = vmatprep.subr.bf16.mxu0 0
        %1183 = vmatpush1.bf16.xpose.msra.mxu0 0
        %1184 = vmatprep.subr.bf16.mxu0 0
        %1185 = vmatpush1.bf16.xpose.msra.mxu0 0
        %1186 = vmatprep.subr.bf16.mxu0 0
        %1187 = vmatpush1.bf16.xpose.msra.mxu0 0
        %1188 = vmatprep.subr.bf16.mxu0 0
        %1189 = vmatpush1.bf16.xpose.msra.mxu0 0
        %1190 = vmatprep.subr.bf16.mxu0 0
        %1191 = vmatpush1.bf16.xpose.msra.mxu0 0
        %1192 = vmatprep.subr.bf16.mxu0 0
        %1193 = vmatpush1.bf16.xpose.msra.mxu0 0
        %1194 = vmatprep.subr.bf16.mxu0 0
        %1195 = vmatpush1.bf16.xpose.msra.mxu0 0
        %1196 = vmatprep.subr.bf16.mxu0 0
        %1197 = vmatpush1.bf16.xpose.msra.mxu0 0
        %1198 = vmatprep.subr.bf16.mxu0 0
        %1199 = vmatpush1.bf16.xpose.msra.mxu0 0
        %1200 = vmatprep.subr.bf16.mxu0 0
        %1201 = vmatpush1.bf16.xpose.msra.mxu0 0
        %1202 = vmatprep.subr.bf16.mxu0 0
        %1203 = vmatpush1.bf16.xpose.msra.mxu0 0
        %1204 = vmatprep.subr.bf16.mxu0 0
        %1205 = vmatpush1.bf16.xpose.msra.mxu0 0
        %1206 = vmatprep.subr.bf16.mxu0 0
        %1207 = vmatpush1.bf16.xpose.msra.mxu0 0
        %1208 = vmatprep.subr.bf16.mxu0 0
        %1209 = vmatpush1.bf16.xpose.msra.mxu0 0
        %1210 = vmatprep.mubr.bf16.mxu0 0
        %1211 = vmatmul.mubr.bf16.gmra.mrb[0].mxu0 %v1173
        %v1212 = vpop.f32.mrb[0].mxu0
        %v1213 = vadd.f32 0.0, %v1212
        %v1214 = vpop.f32.mrb[0].mxu0
        %v1215 = vpop.f32.mrb[0].mxu0
        %v1216 = vpop.f32.mrb[0].mxu0
        %1217 = vdwg.mxu0
        %v1219 = vsel %vm854, %v845, 0
        %v1222 = vsel %vm854, %v1079, 0
        %1224 = vmatprep.subr.bf16.mxu0 0
        %1225 = vmatpush1.bf16.xpose.msra.mxu0 %v1222
        %1226 = vmatprep.subr.bf16.mxu0 0
        %1227 = vmatpush1.bf16.xpose.msra.mxu0 0
        %1228 = vmatprep.subr.bf16.mxu0 0
        %1229 = vmatpush1.bf16.xpose.msra.mxu0 0
        %1230 = vmatprep.subr.bf16.mxu0 0
        %1231 = vmatpush1.bf16.xpose.msra.mxu0 0
        %1232 = vmatprep.subr.bf16.mxu0 0
        %1233 = vmatpush1.bf16.xpose.msra.mxu0 0
        %1234 = vmatprep.subr.bf16.mxu0 0
        %1235 = vmatpush1.bf16.xpose.msra.mxu0 0
        %1236 = vmatprep.subr.bf16.mxu0 0
        %1237 = vmatpush1.bf16.xpose.msra.mxu0 0
        %1238 = vmatprep.subr.bf16.mxu0 0
        %1239 = vmatpush1.bf16.xpose.msra.mxu0 0
        %1240 = vmatprep.subr.bf16.mxu0 0
        %1241 = vmatpush1.bf16.xpose.msra.mxu0 0
        %1242 = vmatprep.subr.bf16.mxu0 0
        %1243 = vmatpush1.bf16.xpose.msra.mxu0 0
        %1244 = vmatprep.subr.bf16.mxu0 0
        %1245 = vmatpush1.bf16.xpose.msra.mxu0 0
        %1246 = vmatprep.subr.bf16.mxu0 0
        %1247 = vmatpush1.bf16.xpose.msra.mxu0 0
        %1248 = vmatprep.subr.bf16.mxu0 0
        %1249 = vmatpush1.bf16.xpose.msra.mxu0 0
        %1250 = vmatprep.subr.bf16.mxu0 0
        %1251 = vmatpush1.bf16.xpose.msra.mxu0 0
        %1252 = vmatprep.subr.bf16.mxu0 0
        %1253 = vmatpush1.bf16.xpose.msra.mxu0 0
        %1254 = vmatprep.subr.bf16.mxu0 0
        %1255 = vmatpush1.bf16.xpose.msra.mxu0 0
        %1256 = vmatprep.mubr.bf16.mxu0 0
        %1257 = vmatmul.mubr.bf16.gmra.mrb[0].mxu0 %v1219
        %v1258 = vpop.f32.mrb[0].mxu0
        %v1259 = vadd.f32 0.0, %v1258
        %v1260 = vpop.f32.mrb[0].mxu0
        %v1261 = vpop.f32.mrb[0].mxu0
        %v1262 = vpop.f32.mrb[0].mxu0
        %1263 = vdwg.mxu0
        %v1264 = vrcp.pop %v1066
        %v1265 = vrcp.pop %v1069
        %v1266 = vrcp.pop %v1072
        %v1267 = vrcp.pop %v1075
        %v1272 = vlaneseq
        %v1273 = vand.u32 %v1272, 127
        %v1274 = vlaneseq
        %v1275 = vshrl.u32 %v1274, 7
        %v1276 = vsub.s32 %v1273, %v1275
        %v1277 = vrot.slane %v1264, %v1276
        %v1278 = vlaneseq
        %v1279 = vshrl.u32 %v1278, 7
        %v1280 = vsub.s32 %v1273, %v1279
        %v1281 = vrot.slane %v1265, %v1280
        %v1282 = vlaneseq
        %v1283 = vshrl.u32 %v1282, 7
        %v1284 = vsub.s32 %v1273, %v1283
        %v1285 = vrot.slane %v1266, %v1284
        %v1286 = vlaneseq
        %v1287 = vshrl.u32 %v1286, 7
        %v1288 = vsub.s32 %v1273, %v1287
        %v1289 = vrot.slane %v1267, %v1288
        %vm1290 = vcmask 1042434
        %v1291 = vsel %vm1290, %v1277, %v1277
        %vm1292 = vcmask 1043459
        %v1293 = vsel %vm1292, %v1277, %v1291
        %vm1294 = vcmask 1044484
        %v1295 = vsel %vm1294, %v1277, %v1293
        %vm1296 = vcmask 1045509
        %v1297 = vsel %vm1296, %v1277, %v1295
        %vm1298 = vcmask 1046534
        %v1299 = vsel %vm1298, %v1277, %v1297
        %vm1300 = vcmask 1047559
        %v1301 = vsel %vm1300, %v1277, %v1299
        %v1302 = vsel %vm1290, %v1281, %v1281
        %v1303 = vsel %vm1292, %v1281, %v1302
        %v1304 = vsel %vm1294, %v1281, %v1303
        %v1305 = vsel %vm1296, %v1281, %v1304
        %v1306 = vsel %vm1298, %v1281, %v1305
        %v1307 = vsel %vm1300, %v1281, %v1306
        %v1308 = vsel %vm1290, %v1285, %v1285
        %v1309 = vsel %vm1292, %v1285, %v1308
        %v1310 = vsel %vm1294, %v1285, %v1309
        %v1311 = vsel %vm1296, %v1285, %v1310
        %v1312 = vsel %vm1298, %v1285, %v1311
        %v1313 = vsel %vm1300, %v1285, %v1312
        %v1314 = vsel %vm1290, %v1289, %v1289
        %v1315 = vsel %vm1292, %v1289, %v1314
        %v1316 = vsel %vm1294, %v1289, %v1315
        %v1317 = vsel %vm1296, %v1289, %v1316
        %v1318 = vsel %vm1298, %v1289, %v1317
        %v1319 = vsel %vm1300, %v1289, %v1318
        %v1324 = vmul.f32 %v1121, %v1301
        %v1325 = vmul.f32 %v1167, %v1307
        %v1326 = vmul.f32 %v1213, %v1313
        %v1327 = vmul.f32 %v1259, %v1319
        %v1328 = vpack.c.bf16 %v1325, %v1324
        %v1329 = vpack.c.bf16 %v1327, %v1326
        %v1330 = vld [vmem:[#allocation13] sm:$0xf]
        %v1331 = vld [vmem:[#allocation13 + $0x4] sm:$0xf]
        %v1332 = vld [vmem:[#allocation13 + $0x8] sm:$0xf]
        %v1333 = vld [vmem:[#allocation13 + $0xc] sm:$0xf]
        %v1334 = vld [vmem:[#allocation15] sm:$0x1]
        %v1336 = vlaneseq
        %v1337 = vshrl.u32 %v1336, 7
        %v1338 = vsub.s32 0, %v1337
        %v1339 = vrot.slane %v1334, %v1338
        %1341 = vxpose.xlu0.c.b16.start [1/8] %v1328, 128
        %1342 = vxpose.xlu0.c.b16.cont [2/8] %v1329, 128
        %1343 = vxpose.xlu0.c.b16.cont [3/8] 0, 128
        %1344 = vxpose.xlu0.c.b16.cont [4/8] 0, 128
        %1345 = vxpose.xlu0.c.b16.cont [5/8] 0, 128
        %1346 = vxpose.xlu0.c.b16.cont [6/8] 0, 128
        %1347 = vxpose.xlu0.c.b16.cont [7/8] 0, 128
        %1348 = vxpose.xlu0.c.b16.end [8/8] 0, 128
        %v1349 = vpop.trf.xlu0
        %v1350 = vpop.trf.xlu0
        %v1351 = vpop.trf.xlu0
        %v1352 = vpop.trf.xlu0
        %v1353 = vpop.trf.xlu0
        %v1354 = vpop.trf.xlu0
        %v1355 = vpop.trf.xlu0
        %v1356 = vpop.trf.xlu0
        %v1361 = vunpack.c.l.b16 %v1330
        %v1362 = vunpack.c.l.b16 %v1331
        %v1363 = vunpack.c.l.b16 %v1332
        %v1364 = vunpack.c.l.b16 %v1333
        %v1365 = vpack.c.b16 %v1362, %v1361
        %v1366 = vpack.c.b16 %v1364, %v1363
        %vm1369 = vcmask 261120
        %v1371 = vsel %vm1369, %v1349, 0
        %1373 = vmatprep.subr.bf16.mxu0 0
        %1374 = vmatpush1.bf16.msra.mxu0 %v1365
        %1375 = vmatprep.subr.bf16.mxu0 0
        %1376 = vmatpush1.bf16.msra.mxu0 %v1366
        %1377 = vmatprep.subr.bf16.mxu0 0
        %1378 = vmatpush1.bf16.msra.mxu0 0
        %1379 = vmatprep.subr.bf16.mxu0 0
        %1380 = vmatpush1.bf16.msra.mxu0 0
        %1381 = vmatprep.subr.bf16.mxu0 0
        %1382 = vmatpush1.bf16.msra.mxu0 0
        %1383 = vmatprep.subr.bf16.mxu0 0
        %1384 = vmatpush1.bf16.msra.mxu0 0
        %1385 = vmatprep.subr.bf16.mxu0 0
        %1386 = vmatpush1.bf16.msra.mxu0 0
        %1387 = vmatprep.subr.bf16.mxu0 0
        %1388 = vmatpush1.bf16.msra.mxu0 0
        %1389 = vmatprep.subr.bf16.mxu0 0
        %1390 = vmatpush1.bf16.msra.mxu0 0
        %1391 = vmatprep.subr.bf16.mxu0 0
        %1392 = vmatpush1.bf16.msra.mxu0 0
        %1393 = vmatprep.subr.bf16.mxu0 0
        %1394 = vmatpush1.bf16.msra.mxu0 0
        %1395 = vmatprep.subr.bf16.mxu0 0
        %1396 = vmatpush1.bf16.msra.mxu0 0
        %1397 = vmatprep.subr.bf16.mxu0 0
        %1398 = vmatpush1.bf16.msra.mxu0 0
        %1399 = vmatprep.subr.bf16.mxu0 0
        %1400 = vmatpush1.bf16.msra.mxu0 0
        %1401 = vmatprep.subr.bf16.mxu0 0
        %1402 = vmatpush1.bf16.msra.mxu0 0
        %1403 = vmatprep.subr.bf16.mxu0 0
        %1404 = vmatpush1.bf16.msra.mxu0 0
        %1405 = vmatprep.mubr.bf16.mxu0 0
        %1406 = vmatmul.mubr.bf16.gmra.mrb[0].mxu0 %v1371
        %v1407 = vpop.f32.mrb[0].mxu0
        %v1408 = vadd.f32 %v1339, %v1407
        %v1409 = vpop.f32.mrb[0].mxu0
        %v1410 = vpop.f32.mrb[0].mxu0
        %v1411 = vpop.f32.mrb[0].mxu0
        %1412 = vdwg.mxu0
        %v1413 = vld [vmem:[%s436] sm:$0xff]
        %v1414 = vadd.f32 %v1408, %v1413
        %v1415 = vsel %vm1369, %v1414, 0.0
        %1416 = vadd.xlane.f32.xlu0 %v1415
        %v1417 = vpop.xlane.xlu0 %1416
        %v1418 = vrcp.pop 32.0
        %v1419 = vmul.f32 %v1417, %v1418
        %v1420 = vsub.f32 %v1414, %v1419
        %v1421 = vmul.f32 %v1420, %v1420
        %v1422 = vsel %vm1369, %v1421, 0.0
        %1423 = vadd.xlane.f32.xlu0 %v1422
        %v1424 = vpop.xlane.xlu0 %1423
        %v1425 = vmul.f32 %v1424, %v1418
        %v1426 = vadd.f32 %v1425, 1e-12
        %v1427 = vrsqrt.pop %v1426
        %v1428 = vmul.f32 %v1420, %v1427
        %v1429 = vld [vmem:[#allocation16] sm:$0x1]
        %v1431 = vlaneseq
        %v1432 = vshrl.u32 %v1431, 7
        %v1433 = vsub.s32 0, %v1432
        %v1434 = vrot.slane %v1429, %v1433
        %v1436 = vmul.f32 %v1428, %v1434
        %v1437 = vld [vmem:[#allocation18] sm:$0x1]
        %v1439 = vlaneseq
        %v1440 = vshrl.u32 %v1439, 7
        %v1441 = vsub.s32 0, %v1440
        %v1442 = vrot.slane %v1437, %v1441
        %v1444 = vadd.f32 %v1436, %v1442
        %1445 = vst.msk [vmem:[%s511] sm:$0xff] %vm1369, %v1444
        %s1446 = sand.u32 %s260, 1
        %s1447 = scalar_lea.sflag [#allocation6], %s1446
        %s1448 = sand.u32 %s260, 1
        %s1449 = smul.addr %s1448, 8
        %s1450 = scalar_lea.vmem [#allocation19], %s1449
        // Predicated region
        $region97: #{tpu_custom_call.1} parent=55 // pred_check
          %p1451 = pneg %p270
        $region98: #{tpu_custom_call.1} parent=55 // pred_check_branch
          %1453 = sbr.rel (%p1451) target = $region100
        $region99: #{tpu_custom_call.1} parent=55 // pred_region
          %s1455 = ssub.s32 128, 128
          %1456 = vsyncadd %s1447, %s1455
          %s1457 = sadd.s32 %s37, %s36
          %s1458 = smul.addr %s1457, 128
          %s1459 = scalar_lea.hbm %s9, %s1458
          %s1461 = sshll.u32 %s1450, 4
          %s1462 = int_to_ptr.vmem [resolvable:$true] %s1461
          %1464 = dma.vmem_to_hbm [thread:$0]  %s1462, 128, %s1459, %s1447
        $region100: #{tpu_custom_call.1} parent=55 // pred_fallthru
          _
      $region56: #{tpu_custom_call.1} parent=5 // pred_fallthru
        _
      %p1465 = scmp.le.s32.totalorder 2, %s27
      // Predicated region
      $region101: #{tpu_custom_call.1} parent=5 // pred_check
        %p1466 = pneg %p1465
      $region102: #{tpu_custom_call.1} parent=5 // pred_check_branch
        %1468 = sbr.rel (%p1466) target = $region104
      $region103: #{tpu_custom_call.1} parent=5 // pred_region
        %s1469 = ssub.s32 %s27, 2
        // Predicated region
        $region105: #{tpu_custom_call.1} parent=103 // pred_check
          %p1470 = pneg %p276
        $region106: #{tpu_custom_call.1} parent=103 // pred_check_branch
          %1472 = sbr.rel (%p1470) target = $region108
        $region107: #{tpu_custom_call.1} parent=103 // pred_region
          %s1473 = sand.u32 %s261, 1
          %s1474 = scalar_lea.sflag [#allocation6], %s1473
          %s1475 = sand.u32 %s261, 1
          %s1476 = smul.addr %s1475, 8
          %s1477 = scalar_lea.vmem [#allocation19], %s1476
          %1478 = dma.done %s1474, 128
        $region108: #{tpu_custom_call.1} parent=103 // pred_fallthru
          _
      $region104: #{tpu_custom_call.1} parent=5 // pred_fallthru
        _
    $region6: #{tpu_custom_call.1} parent=1 // loop_footer
      %s31 = sadd.s32 1, %s27
    $region7: #{tpu_custom_call.1} parent=1 // loop_footer_branch
      %26 = sbr.rel target = $region3
    $region8: #{tpu_custom_call.1} parent=1 // loop_exit
      _
    %1479 = vsyncpa [#allocation5], 1
    %s1480 = scalar_lea.sflag [#allocation5], 1
    %1481 = vsyncpa %s1480, 1
    %1482 = vsyncpa [#allocation8], 1
    %s1483 = scalar_lea.sflag [#allocation8], 1
    %1484 = vsyncpa %s1483, 1
    %1485 = vsyncpa [#allocation11], 1
    %1486 = vsyncpa [#allocation14], 1
    %1487 = vsyncpa [#allocation17], 1
    %1488 = vsyncpa [#allocation6], 1
    %s1489 = scalar_lea.sflag [#allocation6], 1
    %1490 = vsyncpa %s1489, 1

</llo_original>
